<compile_context>
chip_gen: v5e
topology: v5e:2x2
jax: 0.10.0
libtpu: 0.0.40
codegen_flags: <defaults>
</compile_context>

<pallas_src>
import functools

import jax
import jax.numpy as jnp
from jax.experimental import pallas as pl
from jax.experimental.pallas import tpu as pltpu


# ----------------------------------------------------------------------------
# Kernel
# ----------------------------------------------------------------------------
def _nce_partial_kernel(scores_ref, masks_ref, out_ref, *,
                        inv_temp, out_flag, tb, valid_rows):
    """One grid step: (tb, N) rows -> partial sum of per-row NCE losses.

    The partial sum is broadcast into a lane-dense (8, 128) output tile; the
    host-side wrapper picks element [0, 0] of each tile and finishes the mean.
    """
    i = pl.program_id(0)

    s = scores_ref[...].astype(jnp.float32)                        # (tb, N)
    m = masks_ref[...].astype(jnp.float32)                         # (tb, N)

    # max(scores * inv_temp) == inv_temp * max(scores) for inv_temp > 0, so
    # fold the temperature into the shift: one scaled full-tile temporary.
    row_max = jnp.max(s, axis=1, keepdims=True)                    # (tb, 1)
    shifted = (s - row_max) * inv_temp                             # (tb, N)
    e = jnp.exp(shifted)                                           # single EUP pass
    sumexp = jnp.sum(e, axis=1, keepdims=True)                     # (tb, 1)
    num_pos = jnp.sum(m, axis=1, keepdims=True)                    # (tb, 1)

    if out_flag:
        # -(log_softmax(x) * m).sum(1) / num_pos
        #   == log(sumexp) - (shifted * m).sum(1) / num_pos
        masked = jnp.sum(shifted * m, axis=1, keepdims=True)       # (tb, 1)
        row_loss = jnp.log(sumexp) - masked / num_pos
    else:
        # -log((softmax(x) * m).sum(1) / num_pos), reusing e (no second exp).
        p_sum = jnp.sum(e * m, axis=1, keepdims=True) / sumexp     # (tb, 1)
        row_loss = -jnp.log(p_sum / num_pos)

    # Zero out rows past the true batch size (un-padded partial last block).
    row_ids = i * tb + jax.lax.broadcasted_iota(jnp.int32, (tb, 1), 0)
    row_loss = jnp.where(row_ids < valid_rows, row_loss, 0.0)

    partial = jnp.sum(row_loss, axis=0, keepdims=True)             # (1, 1)
    out_ref[...] = jnp.broadcast_to(partial, (8, 128))             # lane-dense vst


# ----------------------------------------------------------------------------
# Tiling / wrapper
# ----------------------------------------------------------------------------
_VMEM_LIMIT_BYTES = 48 * 1024 * 1024    # scoped limit, safe on v7x's 64 MiB VMEM
_VMEM_SIZING_BUDGET = 40 * 1024 * 1024  # budget for 2x inputs + f32 temporaries
_SMALL_INPUT_ELEMS = 32 * 1024          # below this, use the pure-JAX path
_CONCAT_BYTES_LIMIT = 4 * 1024 * 1024   # only concat small same-shape list pairs


def _round_up(x, m):
    return -(-x // m) * m


def _sublane_multiple(dtype):
    """Row multiple matching the sublane packing of `dtype` (8/16/32)."""
    itemsize = jnp.dtype(dtype).itemsize
    return max(8, min(32, 32 // max(itemsize, 1)))


def _pick_row_tile(B, N, scores_itemsize, masks_itemsize, row_mult):
    """Largest row tile fitting the VMEM budget, >=2 blocks when B allows."""
    io_per_row = N * (scores_itemsize + masks_itemsize)   # double-buffered inputs
    tmp_per_row = 4 * N * 4                               # f32 full-tile temporaries
    per_row = 2 * io_per_row + tmp_per_row
    tb = max(_VMEM_SIZING_BUDGET // max(per_row, 1), 1)
    tb = max((tb // row_mult) * row_mult, row_mult)
    # Keep >= 2 grid blocks when the batch allows it (v7x has 2 TCs sharing
    # the "parallel" grid axis), and never a block taller than the batch.
    half = _round_up(-(-B // 2), row_mult)
    tb = min(tb, max(half, row_mult), _round_up(B, row_mult))
    return tb


def _row_loss_sum_pallas(scores, masks, *, temperature, out):
    """Sum over rows of the per-row weighted-NCE loss (scalar float32)."""
    B, N = scores.shape
    assert masks.shape == (B, N)
    if masks.dtype == jnp.bool_:
        masks = masks.astype(jnp.int8)   # same bytes/elem, Pallas-friendly

    row_mult = max(_sublane_multiple(scores.dtype), _sublane_multiple(masks.dtype))
    tb = _pick_row_tile(B, N, scores.dtype.itemsize, masks.dtype.itemsize, row_mult)
    num_blocks = pl.cdiv(B, tb)
    # NOTE: no host-side padding — the partial last block reads whatever lies
    # past row B and the in-kernel row-validity mask zeroes those rows.
    # TODO(synk): stream over N (online log-sum-exp over lane blocks) if a
    # single (row_mult, N) slab ever exceeds the VMEM budget.
    # TODO(synk): if this forward is ever differentiated, the where+NaN on
    # garbage/zero-num_pos rows needs a custom VJP to keep gradients finite.

    kernel = functools.partial(
        _nce_partial_kernel,
        inv_temp=1.0 / float(temperature),
        out_flag=bool(out),
        tb=tb,
        valid_rows=B,
    )

    in_bytes = B * N * (scores.dtype.itemsize + masks.dtype.itemsize)
    cost = pl.CostEstimate(
        flops=8 * B * N,                        # elementwise + reductions
        transcendentals=B * N + 2 * B,          # exp per element, logs per row
        bytes_accessed=in_bytes + num_blocks * 8 * 128 * 4,
    )

    partials = pl.pallas_call(
        kernel,
        out_shape=jax.ShapeDtypeStruct((num_blocks * 8, 128), jnp.float32),
        grid_spec=pltpu.PrefetchScalarGridSpec(
            num_scalar_prefetch=0,
            grid=(num_blocks,),
            in_specs=[
                pl.BlockSpec((tb, N), lambda i: (i, 0)),
                pl.BlockSpec((tb, N), lambda i: (i, 0)),
            ],
            out_specs=pl.BlockSpec((8, 128), lambda i: (i, 0)),
        ),
        compiler_params=pltpu.CompilerParams(
            dimension_semantics=("parallel",),   # no carried state -> TC-shardable
            vmem_limit_bytes=_VMEM_LIMIT_BYTES,
        ),
        cost_estimate=cost,
    )(scores, masks)

    # One scalar per block; reshape is a free view (vs. a strided [::8] gather).
    return jnp.sum(partials.reshape(num_blocks, 8, 128)[:, 0, 0])


def _row_loss_sum_ref(scores, masks, *, temperature, out):
    """Pure-JAX row-loss sum (used for tiny inputs and as the test reference)."""
    x = scores.astype(jnp.float32) / temperature
    m = masks.astype(jnp.float32)
    logp = jax.nn.log_softmax(x, axis=1)
    num_pos = m.sum(1)
    if out:
        loss = -(logp * m).sum(1) / num_pos
    else:
        loss = -jnp.log((jnp.exp(logp) * m).sum(1) / num_pos)
    return jnp.sum(loss)


def _row_loss_sum(scores, masks, *, temperature, out):
    scores = jnp.asarray(scores)
    masks = jnp.asarray(masks)
    B, N = scores.shape
    if B * N < _SMALL_INPUT_ELEMS:
        # Launch + pipeline priming would dominate; XLA-fused path is fine.
        return _row_loss_sum_ref(scores, masks, temperature=temperature, out=out)
    return _row_loss_sum_pallas(scores, masks, temperature=temperature, out=out)


# ----------------------------------------------------------------------------
# Module
# ----------------------------------------------------------------------------
class WeightedMultiNCELoss:
    """JAX/Pallas port of the PyTorch WeightedMultiNCELoss module."""

    def __init__(self, output_fn, temperature=0.1, out=True, **kwargs):
        self.temperature = temperature
        self.out = out
        self.output_fn = output_fn

    def _calculate_loss(self, scores, masks):
        scores = jnp.asarray(scores)
        masks = jnp.asarray(masks)
        B = scores.shape[0]
        total = _row_loss_sum(scores, masks,
                              temperature=self.temperature, out=self.out)
        return total / jnp.float32(B)

    def __call__(self, model_output):
        scores, masks = self.output_fn(model_output)
        if isinstance(scores, (list, tuple)):
            scores = [jnp.asarray(s) for s in scores]
            masks = [jnp.asarray(m) for m in masks]
            shapes = {s.shape for s in scores}
            mask_shapes = {m.shape for m in masks}
            total_bytes = (sum(s.size * s.dtype.itemsize for s in scores)
                           + sum(m.size * m.dtype.itemsize for m in masks))
            if (len(shapes) == 1 and shapes == mask_shapes
                    and total_bytes <= _CONCAT_BYTES_LIMIT):
                # Small same-shape pairs: one call amortizes launch overhead
                # and the concat copy is cheap.  sum_p mean_p == total / B_pair.
                B = scores[0].shape[0]
                total = _row_loss_sum(jnp.concatenate(scores, axis=0),
                                      jnp.concatenate(masks, axis=0),
                                      temperature=self.temperature, out=self.out)
                return total / jnp.float32(B)
            # Large or ragged pairs: one roofline-bound call per pair beats an
            # extra full HBM pass from jnp.concatenate.
            losses = jnp.float32(0.0)
            for score, mask in zip(scores, masks):
                losses = losses + self._calculate_loss(score, mask)
            return losses
        return self._calculate_loss(scores, masks)


# ----------------------------------------------------------------------------
# Pure-JAX reference (matches the PyTorch semantics)
# ----------------------------------------------------------------------------
def _reference_loss(scores, masks, temperature=0.1, out=True):
    scores = jnp.asarray(scores)
    B = scores.shape[0]
    return _row_loss_sum_ref(scores, jnp.asarray(masks),
                             temperature=temperature, out=out) / jnp.float32(B)


if __name__ == "__main__":
    key = jax.random.PRNGKey(0)
    ks1, km1, ks2, km2, ks3, km3, ks4, km4 = jax.random.split(key, 8)

    output_fn = lambda mo: mo  # identity glue over (scores, masks)

    # --- Case 1: single pair, Pallas path, B % tb != 0 (un-padded partial
    #     last block), out=True branch.  Masks shipped as int8 (1 B/elem).
    B1, N1 = 200, 512
    scores1 = jax.random.normal(ks1, (B1, N1), dtype=jnp.float32)
    masks1 = (jax.random.uniform(km1, (B1, N1)) < 0.25).astype(jnp.int8)
    masks1 = masks1.at[:, 0].set(1)  # guarantee num_pos > 0 per row

    loss_out = WeightedMultiNCELoss(output_fn, temperature=0.1, out=True)
    got1 = jax.block_until_ready(loss_out((scores1, masks1)))
    want1 = _reference_loss(scores1, masks1, temperature=0.1, out=True)
    assert jnp.allclose(got1, want1, rtol=1e-4, atol=1e-5), (got1, want1)

    # --- Case 2: list of two same-shape pairs (small enough to be stacked
    #     into one pallas_call), out=False branch.
    B2, N2 = 96, 640
    scores2 = jax.random.normal(ks2, (B2, N2), dtype=jnp.float32)
    masks2 = (jax.random.uniform(km2, (B2, N2)) < 0.25).astype(jnp.int8)
    masks2 = masks2.at[:, 0].set(1)
    scores3 = jax.random.normal(ks3, (B2, N2), dtype=jnp.float32)
    masks3 = (jax.random.uniform(km3, (B2, N2)) < 0.25).astype(jnp.int8)
    masks3 = masks3.at[:, 0].set(1)

    loss_in = WeightedMultiNCELoss(output_fn, temperature=0.1, out=False)
    got2 = jax.block_until_ready(
        loss_in(([scores2, scores3], [masks2, masks3])))
    want2 = (_reference_loss(scores2, masks2, temperature=0.1, out=False)
             + _reference_loss(scores3, masks3, temperature=0.1, out=False))
    assert jnp.allclose(got2, want2, rtol=1e-4, atol=1e-5), (got2, want2)

    # --- Case 3: tiny pair -> pure-JAX small-input fallback path.
    B3, N3 = 10, 384
    scores4 = jax.random.normal(ks4, (B3, N3), dtype=jnp.float32)
    masks4 = (jax.random.uniform(km4, (B3, N3)) < 0.25).astype(jnp.int8)
    masks4 = masks4.at[:, 0].set(1)
    got3 = jax.block_until_ready(loss_out((scores4, masks4)))
    want3 = _reference_loss(scores4, masks4, temperature=0.1, out=True)
    assert jnp.allclose(got3, want3, rtol=1e-4, atol=1e-5), (got3, want3)

    print("KERNEL_OK")
</pallas_src>

<mosaic_0001>
module attributes {stable_mosaic.version = 11 : i64} {
  func.func @_nce_partial_kernel(%arg0: i32, %arg1: memref<128x512xf32, #tpu.memory_space<vmem>>, %arg2: memref<128x512xi8, #tpu.memory_space<vmem>>, %arg3: memref<8x128xf32, #tpu.memory_space<vmem>>) attributes {dimension_semantics = [#tpu.dimension_semantics<parallel>], iteration_bounds = array<i64: 2>, scalar_prefetch = 0 : i64, scratch_operands = 0 : i64, tpu.core_type = #tpu.core_type<tc>, window_params = [{transform_indices = @transform_0, window_bounds = array<i64: 128, 512>}, {transform_indices = @transform_1, window_bounds = array<i64: 128, 512>}, {transform_indices = @transform_2, window_bounds = array<i64: 8, 128>}]} {
    %c0 = arith.constant 0 : index
    %c0_0 = arith.constant 0 : index
    %0 = vector.load %arg1[%c0, %c0_0] : memref<128x512xf32, #tpu.memory_space<vmem>>, vector<128x512xf32>
    %c0_1 = arith.constant 0 : index
    %c0_2 = arith.constant 0 : index
    %1 = vector.load %arg2[%c0_1, %c0_2] : memref<128x512xi8, #tpu.memory_space<vmem>>, vector<128x512xi8>
    %2 = arith.sitofp %1 : vector<128x512xi8> to vector<128x512xf32>
    %cst = arith.constant dense<0xFF800000> : vector<128xf32>
    %3 = vector.multi_reduction <maximumf>, %0, %cst [1] : vector<128x512xf32> to vector<128xf32>
    %4 = vector.shape_cast %3 : vector<128xf32> to vector<128x1xf32>
    %5 = vector.broadcast %4 : vector<128x1xf32> to vector<128x512xf32>
    %6 = arith.subf %0, %5 : vector<128x512xf32>
    %cst_3 = arith.constant 1.000000e+01 : f32
    %7 = vector.broadcast %cst_3 : f32 to vector<128x512xf32>
    %8 = arith.mulf %6, %7 : vector<128x512xf32>
    %9 = math.exp %8 : vector<128x512xf32>
    %cst_4 = arith.constant dense<0.000000e+00> : vector<128xf32>
    %10 = vector.multi_reduction <add>, %9, %cst_4 [1] : vector<128x512xf32> to vector<128xf32>
    %11 = vector.shape_cast %10 : vector<128xf32> to vector<128x1xf32>
    %cst_5 = arith.constant dense<0.000000e+00> : vector<128xf32>
    %12 = vector.multi_reduction <add>, %2, %cst_5 [1] : vector<128x512xf32> to vector<128xf32>
    %13 = vector.shape_cast %12 : vector<128xf32> to vector<128x1xf32>
    %14 = arith.mulf %8, %2 : vector<128x512xf32>
    %cst_6 = arith.constant dense<0.000000e+00> : vector<128xf32>
    %15 = vector.multi_reduction <add>, %14, %cst_6 [1] : vector<128x512xf32> to vector<128xf32>
    %16 = vector.shape_cast %15 : vector<128xf32> to vector<128x1xf32>
    %17 = math.log %11 : vector<128x1xf32>
    %18 = arith.divf %16, %13 : vector<128x1xf32>
    %19 = arith.subf %17, %18 : vector<128x1xf32>
    %c128_i32 = arith.constant 128 : i32
    %20 = arith.muli %arg0, %c128_i32 : i32
    %21 = tpu.iota {dimensions = array<i32: 0>} : vector<128x1xi32>
    %22 = vector.broadcast %20 : i32 to vector<128x1xi32>
    %23 = arith.addi %22, %21 : vector<128x1xi32>
    %c200_i32 = arith.constant 200 : i32
    %24 = vector.broadcast %c200_i32 : i32 to vector<128x1xi32>
    %25 = arith.cmpi slt, %23, %24 : vector<128x1xi32>
    %cst_7 = arith.constant 0.000000e+00 : f32
    %26 = vector.broadcast %cst_7 : f32 to vector<128x1xf32>
    %27 = arith.select %25, %19, %26 : vector<128x1xi1>, vector<128x1xf32>
    %cst_8 = arith.constant dense<0.000000e+00> : vector<1xf32>
    %28 = vector.multi_reduction <add>, %27, %cst_8 [0] : vector<128x1xf32> to vector<1xf32>
    %29 = vector.shape_cast %28 : vector<1xf32> to vector<1x1xf32>
    %30 = vector.shape_cast %29 : vector<1x1xf32> to vector<1x1xf32>
    %31 = vector.broadcast %30 : vector<1x1xf32> to vector<8x128xf32>
    %c0_9 = arith.constant 0 : index
    %c0_10 = arith.constant 0 : index
    %32 = vector.load %arg3[%c0_9, %c0_10] : memref<8x128xf32, #tpu.memory_space<vmem>>, vector<8x128xf32>
    tpu.vector_store %arg3[%c0_9, %c0_10], %31 {strides = array<i32>} : memref<8x128xf32, #tpu.memory_space<vmem>>, vector<8x128xf32>,
    return
  }
  func.func @transform_0(%arg0: i32) -> (i32, i32) {
    %c0_i32 = arith.constant 0 : i32
    %c0_i32_0 = arith.constant 0 : i32
    return %arg0, %c0_i32 : i32, i32
  }
  func.func @transform_1(%arg0: i32) -> (i32, i32) {
    %c0_i32 = arith.constant 0 : i32
    %c0_i32_0 = arith.constant 0 : i32
    return %arg0, %c0_i32 : i32, i32
  }
  func.func @transform_2(%arg0: i32) -> (i32, i32) {
    %c0_i32 = arith.constant 0 : i32
    %c0_i32_0 = arith.constant 0 : i32
    return %arg0, %c0_i32 : i32, i32
  }
}

</mosaic_0001>

<llo_original>
// kernel: tpu_custom_call.1
$region0: #{tpu_custom_call.1}
  #allocation0 [shape = 'u32[]', space=smem, size = 0x4, offset = 0x4, fixed_abs, tag = 'smem constant byte address 0x4 - core index']
  #allocation1 [shape = 'u32[72,128]{1,0:T(1,128)}', space=vmem, size = 0x9000, scoped, tag = 'internal scratch']
  %s0 = inlined_call_operand.hbm [shape: f32[200,512], index: 0, kind: input, shape index: {}]
  %s1 = inlined_call_operand.hbm [shape: s8[200,512], index: 1, kind: input, shape index: {}]
  %s2 = inlined_call_operand.hbm [shape: f32[16,128], index: 2, kind: output, shape index: {}]
  %s3 = sld [smem:[#allocation0]]
  $region49: #{tpu_custom_call.1} parent=0
    _
  %s5 = ssub.s32 1, %s3
  %s6 = scalar_select 0, %s5, %s3
  $region1: #{tpu_custom_call.1} parent=0
    #allocation2 [shape = 'u8[524288]{0}', space=vmem, size = 0x80000, scoped, tag = 'input window, operand 0']
    #allocation3 [shape = 's32[2]{0}', space=sflag, size = 0x8, scoped, tag = 'scoped memory for tpu_custom_call.1']
    #allocation4 [shape = 's32[2]{0}', space=sflag, size = 0x8, scoped, tag = 'scoped memory for tpu_custom_call.1']
    #allocation5 [shape = 'u8[131072]{0}', space=vmem, size = 0x20000, scoped, tag = 'input window, operand 1']
    #allocation6 [shape = 's32[2]{0}', space=sflag, size = 0x8, scoped, tag = 'scoped memory for tpu_custom_call.1']
    #allocation7 [shape = 'u8[8192]{0}', space=vmem, size = 0x2000, scoped, tag = 'output window, operand 0']
    %7 = vsyncpa [#allocation3], 0
    %s8 = scalar_lea.sflag [#allocation3], 1
    %9 = vsyncpa %s8, 0
    %10 = vsyncpa [#allocation6], 0
    %s11 = scalar_lea.sflag [#allocation6], 1
    %12 = vsyncpa %s11, 0
    %13 = vsyncpa [#allocation4], 0
    %s14 = scalar_lea.sflag [#allocation4], 1
    %15 = vsyncpa %s14, 0
    loop: start=0, step=1, limit=4
    $region2: #{tpu_custom_call.1} parent=1 // loop_pre_header
      _
    $region3: #{tpu_custom_call.1} parent=1 // loop_header
      %s17 = sphi 0, %s21
      %p18 = scmp.ge.s32.totalorder %s17, 4
      %s27 = sphi 0, %s29
      %s30 = sphi 0, %s27
      %s31 = sphi 0, %s30
      %s47 = sphi 0, %s31
      %s53 = sphi 0, %s55
      %s56 = sphi 0, %s53
      %s57 = sphi 0, %s56
      %s73 = sphi 0, %s57
      %s79 = sphi 0, %s81
      %s82 = sphi 0, %s79
      %s83 = sphi 0, %s82
      %s99 = sphi 0, %s83
    $region4: #{tpu_custom_call.1} parent=1 // loop_header_branch
      %20 = sbr.rel (%p18) target = $region8
    $region5: #{tpu_custom_call.1} parent=1 // loop_body
      %s22 = ssub.s32 %s17, 1
      %s23 = ssub.s32 %s17, 2
      %s24 = sadd.s32 %s17, 1
      %s25 = ssub.s32 %s17, %s24
      %p26 = scmp.eq.s32.totalorder %s25, 0
      %s28 = sadd.s32 %s27, 1
      %s29 = scalar_select %p26, %s27, %s28
      %p32 = pneg %p26
      %p33 = scmp.eq.s32.totalorder %s17, 1
      %p34 = por %p32, %p33
      %p35 = scmp.ne.s32.totalorder %s27, %s30
      %p36 = scmp.eq.s32.totalorder %s17, 0
      %p37 = por %p35, %p36
      %p38 = scmp.ne.s32.totalorder %s27, %s30
      %p39 = scmp.eq.s32.totalorder %s22, 1
      %p40 = por %p38, %p39
      %p41 = scmp.ne.s32.totalorder %s30, %s31
      %p42 = scmp.eq.s32.totalorder %s22, 0
      %p43 = por %p41, %p42
      %p44 = scmp.ne.s32.totalorder %s30, %s31
      %p45 = scmp.eq.s32.totalorder %s23, 1
      %p46 = por %p44, %p45
      %p48 = scmp.ne.s32.totalorder %s31, %s47
      %p49 = scmp.eq.s32.totalorder %s23, 0
      %p50 = por %p48, %p49
      %s51 = ssub.s32 %s17, %s24
      %p52 = scmp.eq.s32.totalorder %s51, 0
      %s54 = sadd.s32 %s53, 1
      %s55 = scalar_select %p52, %s53, %s54
      %p58 = pneg %p52
      %p59 = scmp.eq.s32.totalorder %s17, 1
      %p60 = por %p58, %p59
      %p61 = scmp.ne.s32.totalorder %s53, %s56
      %p62 = scmp.eq.s32.totalorder %s17, 0
      %p63 = por %p61, %p62
      %p64 = scmp.ne.s32.totalorder %s53, %s56
      %p65 = scmp.eq.s32.totalorder %s22, 1
      %p66 = por %p64, %p65
      %p67 = scmp.ne.s32.totalorder %s56, %s57
      %p68 = scmp.eq.s32.totalorder %s22, 0
      %p69 = por %p67, %p68
      %p70 = scmp.ne.s32.totalorder %s56, %s57
      %p71 = scmp.eq.s32.totalorder %s23, 1
      %p72 = por %p70, %p71
      %p74 = scmp.ne.s32.totalorder %s57, %s73
      %p75 = scmp.eq.s32.totalorder %s23, 0
      %p76 = por %p74, %p75
      %s77 = ssub.s32 %s17, %s24
      %p78 = scmp.eq.s32.totalorder %s77, 0
      %s80 = sadd.s32 %s79, 1
      %s81 = scalar_select %p78, %s79, %s80
      %p84 = pneg %p78
      %p85 = scmp.eq.s32.totalorder %s17, 1
      %p86 = por %p84, %p85
      %p87 = scmp.ne.s32.totalorder %s79, %s82
      %p88 = scmp.eq.s32.totalorder %s17, 0
      %p89 = por %p87, %p88
      %p90 = scmp.ne.s32.totalorder %s79, %s82
      %p91 = scmp.eq.s32.totalorder %s22, 1
      %p92 = por %p90, %p91
      %p93 = scmp.ne.s32.totalorder %s82, %s83
      %p94 = scmp.eq.s32.totalorder %s22, 0
      %p95 = por %p93, %p94
      %p96 = scmp.ne.s32.totalorder %s82, %s83
      %p97 = scmp.eq.s32.totalorder %s23, 1
      %p98 = por %p96, %p97
      %p100 = scmp.ne.s32.totalorder %s83, %s99
      %p101 = scmp.eq.s32.totalorder %s23, 0
      %p102 = por %p100, %p101
      %p103 = scmp.le.s32.totalorder 1, %s17
      %p104 = scmp.lt.s32.totalorder %s17, 3
      %p105 = pnand %p103, %p104
      %p106 = pneg %p105
      // Predicated region
      $region9: #{tpu_custom_call.1} parent=5 // pred_check
        _
      $region10: #{tpu_custom_call.1} parent=5 // pred_check_branch
        %108 = sbr.rel (%p105) target = $region12
      $region11: #{tpu_custom_call.1} parent=5 // pred_region
        %s109 = ssub.s32 %s17, 1
      $region12: #{tpu_custom_call.1} parent=5 // pred_fallthru
        _
      %p110 = scmp.lt.s32.totalorder %s17, 2
      // Predicated region
      $region13: #{tpu_custom_call.1} parent=5 // pred_check
        %p111 = pneg %p110
      $region14: #{tpu_custom_call.1} parent=5 // pred_check_branch
        %113 = sbr.rel (%p111) target = $region16
      $region15: #{tpu_custom_call.1} parent=5 // pred_region
        // Predicated region
        $region17: #{tpu_custom_call.1} parent=15 // pred_check
          %p114 = pneg %p37
        $region18: #{tpu_custom_call.1} parent=15 // pred_check_branch
          %116 = sbr.rel (%p114) target = $region20
        $region19: #{tpu_custom_call.1} parent=15 // pred_region
          %s117 = sand.u32 %s27, 1
          %s118 = scalar_lea.sflag [#allocation3], %s117
          %s119 = sand.u32 %s27, 1
          %s120 = smul.addr %s119, 512
          %s121 = scalar_lea.vmem [#allocation2], %s120
          %s122 = smul.u32 16, %s17
          %s123 = ssub.s32 25, %s122
          %p124 = scmp.lt.s32.totalorder %s123, 16
          %s125 = scalar_select %p124, %s123, 16
          %s126 = smul.u32 8, %s125
          %s127 = smul.u32 %s126, 4
          %s128 = ssub.s32 512, %s127
          %s129 = sshll.u32 %s128, 4
          %130 = vsyncadd %s118, %s129
          %p131 = scmp.ne.s32.totalorder 0, %s127
          %s132 = smul.addr %s122, 4
          %s133 = smul.addr %s132, 8
          %s134 = scalar_lea.hbm %s0, %s133
          %s135 = smul.u32 32, %s125
          %s136 = sshll.u32 %s134, 4
          %s137 = int_to_ptr.hbm [resolvable:$true] %s136
          %s138 = sshll.u32 %s121, 4
          %s139 = int_to_ptr.vmem [resolvable:$true] %s138
          %s140 = sshll.u32 %s135, 4
          %144 = dma.hbm_to_vmem [thread:$0]  (%p131), %s137, %s140, %s139, %s118, 512, 512, 32
        $region20: #{tpu_custom_call.1} parent=15 // pred_fallthru
          _
        // Predicated region
        $region21: #{tpu_custom_call.1} parent=15 // pred_check
          %p145 = pneg %p63
        $region22: #{tpu_custom_call.1} parent=15 // pred_check_branch
          %147 = sbr.rel (%p145) target = $region24
        $region23: #{tpu_custom_call.1} parent=15 // pred_region
          %s148 = sand.u32 %s53, 1
          %s149 = scalar_lea.sflag [#allocation6], %s148
          %s150 = sand.u32 %s53, 1
          %s151 = smul.addr %s150, 128
          %s152 = scalar_lea.vmem [#allocation5], %s151
          %s153 = smul.u32 16, %s17
          %s154 = ssub.s32 25, %s153
          %p155 = scmp.lt.s32.totalorder %s154, 16
          %s156 = scalar_select %p155, %s154, 16
          %s157 = smul.u32 2, %s156
          %s158 = smul.u32 %s157, 4
          %s159 = ssub.s32 128, %s158
          %s160 = sshll.u32 %s159, 4
          %161 = vsyncadd %s149, %s160
          %p162 = scmp.ne.s32.totalorder 0, %s158
          %s163 = smul.addr %s153, 4
          %s164 = smul.addr %s163, 2
          %s165 = scalar_lea.hbm %s1, %s164
          %s166 = smul.u32 8, %s156
          %s167 = sshll.u32 %s165, 4
          %s168 = int_to_ptr.hbm [resolvable:$true] %s167
          %s169 = sshll.u32 %s152, 4
          %s170 = int_to_ptr.vmem [resolvable:$true] %s169
          %s171 = sshll.u32 %s166, 4
          %175 = dma.hbm_to_vmem [thread:$0]  (%p162), %s168, %s171, %s170, %s149, 128, 128, 8
        $region24: #{tpu_custom_call.1} parent=15 // pred_fallthru
          _
      $region16: #{tpu_custom_call.1} parent=5 // pred_fallthru
        _
      %p176 = scmp.le.s32.totalorder 1, %s17
      %p177 = scmp.lt.s32.totalorder %s17, 3
      %p178 = pnand %p176, %p177
      %p179 = pneg %p178
      // Predicated region
      $region25: #{tpu_custom_call.1} parent=5 // pred_check
        _
      $region26: #{tpu_custom_call.1} parent=5 // pred_check_branch
        %181 = sbr.rel (%p178) target = $region28
      $region27: #{tpu_custom_call.1} parent=5 // pred_region
        %s182 = ssub.s32 %s17, 1
        %s183 = sand.u32 %s30, 1
        %s184 = scalar_lea.sflag [#allocation3], %s183
        %s185 = sand.u32 %s30, 1
        %s186 = smul.addr %s185, 512
        %s187 = scalar_lea.vmem [#allocation2], %s186
        // Predicated region
        $region29: #{tpu_custom_call.1} parent=27 // pred_check
          %p188 = pneg %p43
        $region30: #{tpu_custom_call.1} parent=27 // pred_check_branch
          %190 = sbr.rel (%p188) target = $region32
        $region31: #{tpu_custom_call.1} parent=27 // pred_region
          %192 = dma.done %s184, 8192
        $region32: #{tpu_custom_call.1} parent=27 // pred_fallthru
          _
        %s193 = sand.u32 %s56, 1
        %s194 = scalar_lea.sflag [#allocation6], %s193
        %s195 = sand.u32 %s56, 1
        %s196 = smul.addr %s195, 128
        %s197 = scalar_lea.vmem [#allocation5], %s196
        // Predicated region
        $region33: #{tpu_custom_call.1} parent=27 // pred_check
          %p198 = pneg %p69
        $region34: #{tpu_custom_call.1} parent=27 // pred_check_branch
          %200 = sbr.rel (%p198) target = $region36
        $region35: #{tpu_custom_call.1} parent=27 // pred_region
          %202 = dma.done %s194, 2048
        $region36: #{tpu_custom_call.1} parent=27 // pred_fallthru
          _
        %s203 = sand.u32 %s30, 1
        %s204 = scalar_lea.sflag [#allocation3], %s203
        %s205 = sand.u32 %s30, 1
        %s206 = smul.addr %s205, 512
        %s207 = scalar_lea.vmem [#allocation2], %s206
        %p208 = pneg %p43
        %p209 = pneg %p40
        %s210 = sand.u32 %s56, 1
        %s211 = scalar_lea.sflag [#allocation6], %s210
        %s212 = sand.u32 %s56, 1
        %s213 = smul.addr %s212, 128
        %s214 = scalar_lea.vmem [#allocation5], %s213
        %p215 = pneg %p69
        %p216 = pneg %p66
        %p217 = pneg %p95
        %p218 = pneg %p92
        %s219 = sand.u32 %s82, 1
        %s220 = scalar_lea.sflag [#allocation4], %s219
        %s221 = sand.u32 %s82, 1
        %s222 = smul.addr %s221, 8
        %s223 = scalar_lea.vmem [#allocation7], %s222
        %s224 = smul.u32 16, %s22
        %s225 = ssub.s32 25, %s224
        %p226 = scmp.lt.s32.totalorder %s225, 16
        %s227 = scalar_select %p226, %s225, 16
        %s228 = smul.u32 8, %s227
        %s229 = smul.u32 %s228, 4
        %s230 = smul.u32 16, %s22
        %s231 = ssub.s32 25, %s230
        %p232 = scmp.lt.s32.totalorder %s231, 16
        %s233 = scalar_select %p232, %s231, 16
        %s234 = smul.u32 2, %s233
        %s235 = smul.u32 %s234, 4
        %v236 = vld [vmem:[%s187] sm:$0xff]
        %v237 = vld [vmem:[%s187 + $0x8] sm:$0xff]
        %v238 = vld [vmem:[%s187 + $0x10] sm:$0xff]
        %v239 = vld [vmem:[%s187 + $0x18] sm:$0xff]
        %v240 = vld [vmem:[%s187 + $0x20] sm:$0xff]
        %v241 = vld [vmem:[%s187 + $0x28] sm:$0xff]
        %v242 = vld [vmem:[%s187 + $0x30] sm:$0xff]
        %v243 = vld [vmem:[%s187 + $0x38] sm:$0xff]
        %v244 = vld [vmem:[%s187 + $0x40] sm:$0xff]
        %v245 = vld [vmem:[%s187 + $0x48] sm:$0xff]
        %v246 = vld [vmem:[%s187 + $0x50] sm:$0xff]
        %v247 = vld [vmem:[%s187 + $0x58] sm:$0xff]
        %v248 = vld [vmem:[%s187 + $0x60] sm:$0xff]
        %v249 = vld [vmem:[%s187 + $0x68] sm:$0xff]
        %v250 = vld [vmem:[%s187 + $0x70] sm:$0xff]
        %v251 = vld [vmem:[%s187 + $0x78] sm:$0xff]
        %v252 = vld [vmem:[%s187 + $0x80] sm:$0xff]
        %v253 = vld [vmem:[%s187 + $0x88] sm:$0xff]
        %v254 = vld [vmem:[%s187 + $0x90] sm:$0xff]
        %v255 = vld [vmem:[%s187 + $0x98] sm:$0xff]
        %v256 = vld [vmem:[%s187 + $0xa0] sm:$0xff]
        %v257 = vld [vmem:[%s187 + $0xa8] sm:$0xff]
        %v258 = vld [vmem:[%s187 + $0xb0] sm:$0xff]
        %v259 = vld [vmem:[%s187 + $0xb8] sm:$0xff]
        %v260 = vld [vmem:[%s187 + $0xc0] sm:$0xff]
        %v261 = vld [vmem:[%s187 + $0xc8] sm:$0xff]
        %v262 = vld [vmem:[%s187 + $0xd0] sm:$0xff]
        %v263 = vld [vmem:[%s187 + $0xd8] sm:$0xff]
        %v264 = vld [vmem:[%s187 + $0xe0] sm:$0xff]
        %v265 = vld [vmem:[%s187 + $0xe8] sm:$0xff]
        %v266 = vld [vmem:[%s187 + $0xf0] sm:$0xff]
        %v267 = vld [vmem:[%s187 + $0xf8] sm:$0xff]
        %v268 = vld [vmem:[%s187 + $0x100] sm:$0xff]
        %v269 = vld [vmem:[%s187 + $0x108] sm:$0xff]
        %v270 = vld [vmem:[%s187 + $0x110] sm:$0xff]
        %v271 = vld [vmem:[%s187 + $0x118] sm:$0xff]
        %v272 = vld [vmem:[%s187 + $0x120] sm:$0xff]
        %v273 = vld [vmem:[%s187 + $0x128] sm:$0xff]
        %v274 = vld [vmem:[%s187 + $0x130] sm:$0xff]
        %v275 = vld [vmem:[%s187 + $0x138] sm:$0xff]
        %v276 = vld [vmem:[%s187 + $0x140] sm:$0xff]
        %v277 = vld [vmem:[%s187 + $0x148] sm:$0xff]
        %v278 = vld [vmem:[%s187 + $0x150] sm:$0xff]
        %v279 = vld [vmem:[%s187 + $0x158] sm:$0xff]
        %v280 = vld [vmem:[%s187 + $0x160] sm:$0xff]
        %v281 = vld [vmem:[%s187 + $0x168] sm:$0xff]
        %v282 = vld [vmem:[%s187 + $0x170] sm:$0xff]
        %v283 = vld [vmem:[%s187 + $0x178] sm:$0xff]
        %v284 = vld [vmem:[%s187 + $0x180] sm:$0xff]
        %v285 = vld [vmem:[%s187 + $0x188] sm:$0xff]
        %v286 = vld [vmem:[%s187 + $0x190] sm:$0xff]
        %v287 = vld [vmem:[%s187 + $0x198] sm:$0xff]
        %v288 = vld [vmem:[%s187 + $0x1a0] sm:$0xff]
        %v289 = vld [vmem:[%s187 + $0x1a8] sm:$0xff]
        %v290 = vld [vmem:[%s187 + $0x1b0] sm:$0xff]
        %v291 = vld [vmem:[%s187 + $0x1b8] sm:$0xff]
        %v292 = vld [vmem:[%s187 + $0x1c0] sm:$0xff]
        %v293 = vld [vmem:[%s187 + $0x1c8] sm:$0xff]
        %v294 = vld [vmem:[%s187 + $0x1d0] sm:$0xff]
        %v295 = vld [vmem:[%s187 + $0x1d8] sm:$0xff]
        %v296 = vld [vmem:[%s187 + $0x1e0] sm:$0xff]
        %v297 = vld [vmem:[%s187 + $0x1e8] sm:$0xff]
        %v298 = vld [vmem:[%s187 + $0x1f0] sm:$0xff]
        %v299 = vld [vmem:[%s187 + $0x1f8] sm:$0xff]
        %v300 = vld [vmem:[%s197] sm:$0xff]
        %v301 = vld [vmem:[%s197 + $0x8] sm:$0xff]
        %v302 = vld [vmem:[%s197 + $0x10] sm:$0xff]
        %v303 = vld [vmem:[%s197 + $0x18] sm:$0xff]
        %v304 = vld [vmem:[%s197 + $0x20] sm:$0xff]
        %v305 = vld [vmem:[%s197 + $0x28] sm:$0xff]
        %v306 = vld [vmem:[%s197 + $0x30] sm:$0xff]
        %v307 = vld [vmem:[%s197 + $0x38] sm:$0xff]
        %v308 = vld [vmem:[%s197 + $0x40] sm:$0xff]
        %v309 = vld [vmem:[%s197 + $0x48] sm:$0xff]
        %v310 = vld [vmem:[%s197 + $0x50] sm:$0xff]
        %v311 = vld [vmem:[%s197 + $0x58] sm:$0xff]
        %v312 = vld [vmem:[%s197 + $0x60] sm:$0xff]
        %v313 = vld [vmem:[%s197 + $0x68] sm:$0xff]
        %v314 = vld [vmem:[%s197 + $0x70] sm:$0xff]
        %v315 = vld [vmem:[%s197 + $0x78] sm:$0xff]
        %v316 = vunpack.c.0.s8 %v300
        %v317 = vunpack.c.1.s8 %v300
        %v318 = vunpack.c.2.s8 %v300
        %v319 = vunpack.c.3.s8 %v300
        %v320 = vunpack.c.0.s8 %v301
        %v321 = vunpack.c.1.s8 %v301
        %v322 = vunpack.c.2.s8 %v301
        %v323 = vunpack.c.3.s8 %v301
        %v324 = vunpack.c.0.s8 %v302
        %v325 = vunpack.c.1.s8 %v302
        %v326 = vunpack.c.2.s8 %v302
        %v327 = vunpack.c.3.s8 %v302
        %v328 = vunpack.c.0.s8 %v303
        %v329 = vunpack.c.1.s8 %v303
        %v330 = vunpack.c.2.s8 %v303
        %v331 = vunpack.c.3.s8 %v303
        %v332 = vunpack.c.0.s8 %v304
        %v333 = vunpack.c.1.s8 %v304
        %v334 = vunpack.c.2.s8 %v304
        %v335 = vunpack.c.3.s8 %v304
        %v336 = vunpack.c.0.s8 %v305
        %v337 = vunpack.c.1.s8 %v305
        %v338 = vunpack.c.2.s8 %v305
        %v339 = vunpack.c.3.s8 %v305
        %v340 = vunpack.c.0.s8 %v306
        %v341 = vunpack.c.1.s8 %v306
        %v342 = vunpack.c.2.s8 %v306
        %v343 = vunpack.c.3.s8 %v306
        %v344 = vunpack.c.0.s8 %v307
        %v345 = vunpack.c.1.s8 %v307
        %v346 = vunpack.c.2.s8 %v307
        %v347 = vunpack.c.3.s8 %v307
        %v348 = vunpack.c.0.s8 %v308
        %v349 = vunpack.c.1.s8 %v308
        %v350 = vunpack.c.2.s8 %v308
        %v351 = vunpack.c.3.s8 %v308
        %v352 = vunpack.c.0.s8 %v309
        %v353 = vunpack.c.1.s8 %v309
        %v354 = vunpack.c.2.s8 %v309
        %v355 = vunpack.c.3.s8 %v309
        %v356 = vunpack.c.0.s8 %v310
        %v357 = vunpack.c.1.s8 %v310
        %v358 = vunpack.c.2.s8 %v310
        %v359 = vunpack.c.3.s8 %v310
        %v360 = vunpack.c.0.s8 %v311
        %v361 = vunpack.c.1.s8 %v311
        %v362 = vunpack.c.2.s8 %v311
        %v363 = vunpack.c.3.s8 %v311
        %v364 = vunpack.c.0.s8 %v312
        %v365 = vunpack.c.1.s8 %v312
        %v366 = vunpack.c.2.s8 %v312
        %v367 = vunpack.c.3.s8 %v312
        %v368 = vunpack.c.0.s8 %v313
        %v369 = vunpack.c.1.s8 %v313
        %v370 = vunpack.c.2.s8 %v313
        %v371 = vunpack.c.3.s8 %v313
        %v372 = vunpack.c.0.s8 %v314
        %v373 = vunpack.c.1.s8 %v314
        %v374 = vunpack.c.2.s8 %v314
        %v375 = vunpack.c.3.s8 %v314
        %v376 = vunpack.c.0.s8 %v315
        %v377 = vunpack.c.1.s8 %v315
        %v378 = vunpack.c.2.s8 %v315
        %v379 = vunpack.c.3.s8 %v315
        %v380 = vcvt.s32.f32 %v316
        %v381 = vcvt.s32.f32 %v317
        %v382 = vcvt.s32.f32 %v318
        %v383 = vcvt.s32.f32 %v319
        %v384 = vcvt.s32.f32 %v320
        %v385 = vcvt.s32.f32 %v321
        %v386 = vcvt.s32.f32 %v322
        %v387 = vcvt.s32.f32 %v323
        %v388 = vcvt.s32.f32 %v324
        %v389 = vcvt.s32.f32 %v325
        %v390 = vcvt.s32.f32 %v326
        %v391 = vcvt.s32.f32 %v327
        %v392 = vcvt.s32.f32 %v328
        %v393 = vcvt.s32.f32 %v329
        %v394 = vcvt.s32.f32 %v330
        %v395 = vcvt.s32.f32 %v331
        %v396 = vcvt.s32.f32 %v332
        %v397 = vcvt.s32.f32 %v333
        %v398 = vcvt.s32.f32 %v334
        %v399 = vcvt.s32.f32 %v335
        %v400 = vcvt.s32.f32 %v336
        %v401 = vcvt.s32.f32 %v337
        %v402 = vcvt.s32.f32 %v338
        %v403 = vcvt.s32.f32 %v339
        %v404 = vcvt.s32.f32 %v340
        %v405 = vcvt.s32.f32 %v341
        %v406 = vcvt.s32.f32 %v342
        %v407 = vcvt.s32.f32 %v343
        %v408 = vcvt.s32.f32 %v344
        %v409 = vcvt.s32.f32 %v345
        %v410 = vcvt.s32.f32 %v346
        %v411 = vcvt.s32.f32 %v347
        %v412 = vcvt.s32.f32 %v348
        %v413 = vcvt.s32.f32 %v349
        %v414 = vcvt.s32.f32 %v350
        %v415 = vcvt.s32.f32 %v351
        %v416 = vcvt.s32.f32 %v352
        %v417 = vcvt.s32.f32 %v353
        %v418 = vcvt.s32.f32 %v354
        %v419 = vcvt.s32.f32 %v355
        %v420 = vcvt.s32.f32 %v356
        %v421 = vcvt.s32.f32 %v357
        %v422 = vcvt.s32.f32 %v358
        %v423 = vcvt.s32.f32 %v359
        %v424 = vcvt.s32.f32 %v360
        %v425 = vcvt.s32.f32 %v361
        %v426 = vcvt.s32.f32 %v362
        %v427 = vcvt.s32.f32 %v363
        %v428 = vcvt.s32.f32 %v364
        %v429 = vcvt.s32.f32 %v365
        %v430 = vcvt.s32.f32 %v366
        %v431 = vcvt.s32.f32 %v367
        %v432 = vcvt.s32.f32 %v368
        %v433 = vcvt.s32.f32 %v369
        %v434 = vcvt.s32.f32 %v370
        %v435 = vcvt.s32.f32 %v371
        %v436 = vcvt.s32.f32 %v372
        %v437 = vcvt.s32.f32 %v373
        %v438 = vcvt.s32.f32 %v374
        %v439 = vcvt.s32.f32 %v375
        %v440 = vcvt.s32.f32 %v376
        %v441 = vcvt.s32.f32 %v377
        %v442 = vcvt.s32.f32 %v378
        %v443 = vcvt.s32.f32 %v379
        %v444 = vmax.f32 %v236, %v237
        %v445 = vmax.f32 %v444, %v238
        %v446 = vmax.f32 %v445, %v239
        %447 = vmax.xlane.f32.xlu0 %v446
        %v448 = vpop.xlane.xlu0 %447
        %v449 = vmax.f32 %v240, %v241
        %v450 = vmax.f32 %v449, %v242
        %v451 = vmax.f32 %v450, %v243
        %452 = vmax.xlane.f32.xlu0 %v451
        %v453 = vpop.xlane.xlu0 %452
        %v454 = vmax.f32 %v244, %v245
        %v455 = vmax.f32 %v454, %v246
        %v456 = vmax.f32 %v455, %v247
        %457 = vmax.xlane.f32.xlu0 %v456
        %v458 = vpop.xlane.xlu0 %457
        %v459 = vmax.f32 %v248, %v249
        %v460 = vmax.f32 %v459, %v250
        %v461 = vmax.f32 %v460, %v251
        %462 = vmax.xlane.f32.xlu0 %v461
        %v463 = vpop.xlane.xlu0 %462
        %v464 = vmax.f32 %v252, %v253
        %v465 = vmax.f32 %v464, %v254
        %v466 = vmax.f32 %v465, %v255
        %467 = vmax.xlane.f32.xlu0 %v466
        %v468 = vpop.xlane.xlu0 %467
        %v469 = vmax.f32 %v256, %v257
        %v470 = vmax.f32 %v469, %v258
        %v471 = vmax.f32 %v470, %v259
        %472 = vmax.xlane.f32.xlu0 %v471
        %v473 = vpop.xlane.xlu0 %472
        %v474 = vmax.f32 %v260, %v261
        %v475 = vmax.f32 %v474, %v262
        %v476 = vmax.f32 %v475, %v263
        %477 = vmax.xlane.f32.xlu0 %v476
        %v478 = vpop.xlane.xlu0 %477
        %v479 = vmax.f32 %v264, %v265
        %v480 = vmax.f32 %v479, %v266
        %v481 = vmax.f32 %v480, %v267
        %482 = vmax.xlane.f32.xlu0 %v481
        %v483 = vpop.xlane.xlu0 %482
        %v484 = vmax.f32 %v268, %v269
        %v485 = vmax.f32 %v484, %v270
        %v486 = vmax.f32 %v485, %v271
        %487 = vmax.xlane.f32.xlu0 %v486
        %v488 = vpop.xlane.xlu0 %487
        %v489 = vmax.f32 %v272, %v273
        %v490 = vmax.f32 %v489, %v274
        %v491 = vmax.f32 %v490, %v275
        %492 = vmax.xlane.f32.xlu0 %v491
        %v493 = vpop.xlane.xlu0 %492
        %v494 = vmax.f32 %v276, %v277
        %v495 = vmax.f32 %v494, %v278
        %v496 = vmax.f32 %v495, %v279
        %497 = vmax.xlane.f32.xlu0 %v496
        %v498 = vpop.xlane.xlu0 %497
        %v499 = vmax.f32 %v280, %v281
        %v500 = vmax.f32 %v499, %v282
        %v501 = vmax.f32 %v500, %v283
        %502 = vmax.xlane.f32.xlu0 %v501
        %v503 = vpop.xlane.xlu0 %502
        %v504 = vmax.f32 %v284, %v285
        %v505 = vmax.f32 %v504, %v286
        %v506 = vmax.f32 %v505, %v287
        %507 = vmax.xlane.f32.xlu0 %v506
        %v508 = vpop.xlane.xlu0 %507
        %v509 = vmax.f32 %v288, %v289
        %v510 = vmax.f32 %v509, %v290
        %v511 = vmax.f32 %v510, %v291
        %512 = vmax.xlane.f32.xlu0 %v511
        %v513 = vpop.xlane.xlu0 %512
        %v514 = vmax.f32 %v292, %v293
        %v515 = vmax.f32 %v514, %v294
        %v516 = vmax.f32 %v515, %v295
        %517 = vmax.xlane.f32.xlu0 %v516
        %v518 = vpop.xlane.xlu0 %517
        %v519 = vmax.f32 %v296, %v297
        %v520 = vmax.f32 %v519, %v298
        %v521 = vmax.f32 %v520, %v299
        %522 = vmax.xlane.f32.xlu0 %v521
        %v523 = vpop.xlane.xlu0 %522
        %v524 = vsub.f32 %v236, %v448
        %v525 = vsub.f32 %v237, %v448
        %v526 = vsub.f32 %v238, %v448
        %v527 = vsub.f32 %v239, %v448
        %v528 = vsub.f32 %v240, %v453
        %v529 = vsub.f32 %v241, %v453
        %v530 = vsub.f32 %v242, %v453
        %v531 = vsub.f32 %v243, %v453
        %v532 = vsub.f32 %v244, %v458
        %v533 = vsub.f32 %v245, %v458
        %v534 = vsub.f32 %v246, %v458
        %v535 = vsub.f32 %v247, %v458
        %v536 = vsub.f32 %v248, %v463
        %v537 = vsub.f32 %v249, %v463
        %v538 = vsub.f32 %v250, %v463
        %v539 = vsub.f32 %v251, %v463
        %v540 = vsub.f32 %v252, %v468
        %v541 = vsub.f32 %v253, %v468
        %v542 = vsub.f32 %v254, %v468
        %v543 = vsub.f32 %v255, %v468
        %v544 = vsub.f32 %v256, %v473
        %v545 = vsub.f32 %v257, %v473
        %v546 = vsub.f32 %v258, %v473
        %v547 = vsub.f32 %v259, %v473
        %v548 = vsub.f32 %v260, %v478
        %v549 = vsub.f32 %v261, %v478
        %v550 = vsub.f32 %v262, %v478
        %v551 = vsub.f32 %v263, %v478
        %v552 = vsub.f32 %v264, %v483
        %v553 = vsub.f32 %v265, %v483
        %v554 = vsub.f32 %v266, %v483
        %v555 = vsub.f32 %v267, %v483
        %v556 = vsub.f32 %v268, %v488
        %v557 = vsub.f32 %v269, %v488
        %v558 = vsub.f32 %v270, %v488
        %v559 = vsub.f32 %v271, %v488
        %v560 = vsub.f32 %v272, %v493
        %v561 = vsub.f32 %v273, %v493
        %v562 = vsub.f32 %v274, %v493
        %v563 = vsub.f32 %v275, %v493
        %v564 = vsub.f32 %v276, %v498
        %v565 = vsub.f32 %v277, %v498
        %v566 = vsub.f32 %v278, %v498
        %v567 = vsub.f32 %v279, %v498
        %v568 = vsub.f32 %v280, %v503
        %v569 = vsub.f32 %v281, %v503
        %v570 = vsub.f32 %v282, %v503
        %v571 = vsub.f32 %v283, %v503
        %v572 = vsub.f32 %v284, %v508
        %v573 = vsub.f32 %v285, %v508
        %v574 = vsub.f32 %v286, %v508
        %v575 = vsub.f32 %v287, %v508
        %v576 = vsub.f32 %v288, %v513
        %v577 = vsub.f32 %v289, %v513
        %v578 = vsub.f32 %v290, %v513
        %v579 = vsub.f32 %v291, %v513
        %v580 = vsub.f32 %v292, %v518
        %v581 = vsub.f32 %v293, %v518
        %v582 = vsub.f32 %v294, %v518
        %v583 = vsub.f32 %v295, %v518
        %v584 = vsub.f32 %v296, %v523
        %v585 = vsub.f32 %v297, %v523
        %v586 = vsub.f32 %v298, %v523
        %v587 = vsub.f32 %v299, %v523
        %v588 = vmul.f32 %v524, 10.0
        %v589 = vmul.f32 %v525, 10.0
        %v590 = vmul.f32 %v526, 10.0
        %v591 = vmul.f32 %v527, 10.0
        %v592 = vmul.f32 %v528, 10.0
        %v593 = vmul.f32 %v529, 10.0
        %v594 = vmul.f32 %v530, 10.0
        %v595 = vmul.f32 %v531, 10.0
        %v596 = vmul.f32 %v532, 10.0
        %v597 = vmul.f32 %v533, 10.0
        %v598 = vmul.f32 %v534, 10.0
        %v599 = vmul.f32 %v535, 10.0
        %v600 = vmul.f32 %v536, 10.0
        %v601 = vmul.f32 %v537, 10.0
        %v602 = vmul.f32 %v538, 10.0
        %v603 = vmul.f32 %v539, 10.0
        %v604 = vmul.f32 %v540, 10.0
        %v605 = vmul.f32 %v541, 10.0
        %v606 = vmul.f32 %v542, 10.0
        %v607 = vmul.f32 %v543, 10.0
        %v608 = vmul.f32 %v544, 10.0
        %v609 = vmul.f32 %v545, 10.0
        %v610 = vmul.f32 %v546, 10.0
        %v611 = vmul.f32 %v547, 10.0
        %v612 = vmul.f32 %v548, 10.0
        %v613 = vmul.f32 %v549, 10.0
        %v614 = vmul.f32 %v550, 10.0
        %v615 = vmul.f32 %v551, 10.0
        %v616 = vmul.f32 %v552, 10.0
        %v617 = vmul.f32 %v553, 10.0
        %v618 = vmul.f32 %v554, 10.0
        %v619 = vmul.f32 %v555, 10.0
        %v620 = vmul.f32 %v556, 10.0
        %v621 = vmul.f32 %v557, 10.0
        %v622 = vmul.f32 %v558, 10.0
        %v623 = vmul.f32 %v559, 10.0
        %v624 = vmul.f32 %v560, 10.0
        %v625 = vmul.f32 %v561, 10.0
        %v626 = vmul.f32 %v562, 10.0
        %v627 = vmul.f32 %v563, 10.0
        %v628 = vmul.f32 %v564, 10.0
        %v629 = vmul.f32 %v565, 10.0
        %v630 = vmul.f32 %v566, 10.0
        %v631 = vmul.f32 %v567, 10.0
        %v632 = vmul.f32 %v568, 10.0
        %v633 = vmul.f32 %v569, 10.0
        %v634 = vmul.f32 %v570, 10.0
        %v635 = vmul.f32 %v571, 10.0
        %v636 = vmul.f32 %v572, 10.0
        %v637 = vmul.f32 %v573, 10.0
        %v638 = vmul.f32 %v574, 10.0
        %v639 = vmul.f32 %v575, 10.0
        %v640 = vmul.f32 %v576, 10.0
        %v641 = vmul.f32 %v577, 10.0
        %v642 = vmul.f32 %v578, 10.0
        %v643 = vmul.f32 %v579, 10.0
        %v644 = vmul.f32 %v580, 10.0
        %v645 = vmul.f32 %v581, 10.0
        %v646 = vmul.f32 %v582, 10.0
        %v647 = vmul.f32 %v583, 10.0
        %v648 = vmul.f32 %v584, 10.0
        %v649 = vmul.f32 %v585, 10.0
        %v650 = vmul.f32 %v586, 10.0
        %v651 = vmul.f32 %v587, 10.0
        %v652 = vmul.f32 %v588, 1.442695
        %v653 = vpow.pop %v652
        %v654 = vmul.f32 %v589, 1.442695
        %v655 = vpow.pop %v654
        %v656 = vmul.f32 %v590, 1.442695
        %v657 = vpow.pop %v656
        %v658 = vmul.f32 %v591, 1.442695
        %v659 = vpow.pop %v658
        %v660 = vmul.f32 %v592, 1.442695
        %v661 = vpow.pop %v660
        %v662 = vmul.f32 %v593, 1.442695
        %v663 = vpow.pop %v662
        %v664 = vmul.f32 %v594, 1.442695
        %v665 = vpow.pop %v664
        %v666 = vmul.f32 %v595, 1.442695
        %v667 = vpow.pop %v666
        %v668 = vmul.f32 %v596, 1.442695
        %v669 = vpow.pop %v668
        %v670 = vmul.f32 %v597, 1.442695
        %v671 = vpow.pop %v670
        %v672 = vmul.f32 %v598, 1.442695
        %v673 = vpow.pop %v672
        %v674 = vmul.f32 %v599, 1.442695
        %v675 = vpow.pop %v674
        %v676 = vmul.f32 %v600, 1.442695
        %v677 = vpow.pop %v676
        %v678 = vmul.f32 %v601, 1.442695
        %v679 = vpow.pop %v678
        %v680 = vmul.f32 %v602, 1.442695
        %v681 = vpow.pop %v680
        %v682 = vmul.f32 %v603, 1.442695
        %v683 = vpow.pop %v682
        %v684 = vmul.f32 %v604, 1.442695
        %v685 = vpow.pop %v684
        %v686 = vmul.f32 %v605, 1.442695
        %v687 = vpow.pop %v686
        %v688 = vmul.f32 %v606, 1.442695
        %v689 = vpow.pop %v688
        %v690 = vmul.f32 %v607, 1.442695
        %v691 = vpow.pop %v690
        %v692 = vmul.f32 %v608, 1.442695
        %v693 = vpow.pop %v692
        %v694 = vmul.f32 %v609, 1.442695
        %v695 = vpow.pop %v694
        %v696 = vmul.f32 %v610, 1.442695
        %v697 = vpow.pop %v696
        %v698 = vmul.f32 %v611, 1.442695
        %v699 = vpow.pop %v698
        %v700 = vmul.f32 %v612, 1.442695
        %v701 = vpow.pop %v700
        %v702 = vmul.f32 %v613, 1.442695
        %v703 = vpow.pop %v702
        %v704 = vmul.f32 %v614, 1.442695
        %v705 = vpow.pop %v704
        %v706 = vmul.f32 %v615, 1.442695
        %v707 = vpow.pop %v706
        %v708 = vmul.f32 %v616, 1.442695
        %v709 = vpow.pop %v708
        %v710 = vmul.f32 %v617, 1.442695
        %v711 = vpow.pop %v710
        %v712 = vmul.f32 %v618, 1.442695
        %v713 = vpow.pop %v712
        %v714 = vmul.f32 %v619, 1.442695
        %v715 = vpow.pop %v714
        %v716 = vmul.f32 %v620, 1.442695
        %v717 = vpow.pop %v716
        %v718 = vmul.f32 %v621, 1.442695
        %v719 = vpow.pop %v718
        %v720 = vmul.f32 %v622, 1.442695
        %v721 = vpow.pop %v720
        %v722 = vmul.f32 %v623, 1.442695
        %v723 = vpow.pop %v722
        %v724 = vmul.f32 %v624, 1.442695
        %v725 = vpow.pop %v724
        %v726 = vmul.f32 %v625, 1.442695
        %v727 = vpow.pop %v726
        %v728 = vmul.f32 %v626, 1.442695
        %v729 = vpow.pop %v728
        %v730 = vmul.f32 %v627, 1.442695
        %v731 = vpow.pop %v730
        %v732 = vmul.f32 %v628, 1.442695
        %v733 = vpow.pop %v732
        %v734 = vmul.f32 %v629, 1.442695
        %v735 = vpow.pop %v734
        %v736 = vmul.f32 %v630, 1.442695
        %v737 = vpow.pop %v736
        %v738 = vmul.f32 %v631, 1.442695
        %v739 = vpow.pop %v738
        %v740 = vmul.f32 %v632, 1.442695
        %v741 = vpow.pop %v740
        %v742 = vmul.f32 %v633, 1.442695
        %v743 = vpow.pop %v742
        %v744 = vmul.f32 %v634, 1.442695
        %v745 = vpow.pop %v744
        %v746 = vmul.f32 %v635, 1.442695
        %v747 = vpow.pop %v746
        %v748 = vmul.f32 %v636, 1.442695
        %v749 = vpow.pop %v748
        %v750 = vmul.f32 %v637, 1.442695
        %v751 = vpow.pop %v750
        %v752 = vmul.f32 %v638, 1.442695
        %v753 = vpow.pop %v752
        %v754 = vmul.f32 %v639, 1.442695
        %v755 = vpow.pop %v754
        %v756 = vmul.f32 %v640, 1.442695
        %v757 = vpow.pop %v756
        %v758 = vmul.f32 %v641, 1.442695
        %v759 = vpow.pop %v758
        %v760 = vmul.f32 %v642, 1.442695
        %v761 = vpow.pop %v760
        %v762 = vmul.f32 %v643, 1.442695
        %v763 = vpow.pop %v762
        %v764 = vmul.f32 %v644, 1.442695
        %v765 = vpow.pop %v764
        %v766 = vmul.f32 %v645, 1.442695
        %v767 = vpow.pop %v766
        %v768 = vmul.f32 %v646, 1.442695
        %v769 = vpow.pop %v768
        %v770 = vmul.f32 %v647, 1.442695
        %v771 = vpow.pop %v770
        %v772 = vmul.f32 %v648, 1.442695
        %v773 = vpow.pop %v772
        %v774 = vmul.f32 %v649, 1.442695
        %v775 = vpow.pop %v774
        %v776 = vmul.f32 %v650, 1.442695
        %v777 = vpow.pop %v776
        %v778 = vmul.f32 %v651, 1.442695
        %v779 = vpow.pop %v778
        %v780 = vadd.f32 %v653, %v655
        %v781 = vadd.f32 %v780, %v657
        %v782 = vadd.f32 %v781, %v659
        %783 = vadd.xlane.f32.xlu0 %v782
        %v784 = vpop.xlane.xlu0 %783
        %v785 = vadd.f32 %v661, %v663
        %v786 = vadd.f32 %v785, %v665
        %v787 = vadd.f32 %v786, %v667
        %788 = vadd.xlane.f32.xlu0 %v787
        %v789 = vpop.xlane.xlu0 %788
        %v790 = vadd.f32 %v669, %v671
        %v791 = vadd.f32 %v790, %v673
        %v792 = vadd.f32 %v791, %v675
        %793 = vadd.xlane.f32.xlu0 %v792
        %v794 = vpop.xlane.xlu0 %793
        %v795 = vadd.f32 %v677, %v679
        %v796 = vadd.f32 %v795, %v681
        %v797 = vadd.f32 %v796, %v683
        %798 = vadd.xlane.f32.xlu0 %v797
        %v799 = vpop.xlane.xlu0 %798
        %v800 = vadd.f32 %v685, %v687
        %v801 = vadd.f32 %v800, %v689
        %v802 = vadd.f32 %v801, %v691
        %803 = vadd.xlane.f32.xlu0 %v802
        %v804 = vpop.xlane.xlu0 %803
        %v805 = vadd.f32 %v693, %v695
        %v806 = vadd.f32 %v805, %v697
        %v807 = vadd.f32 %v806, %v699
        %808 = vadd.xlane.f32.xlu0 %v807
        %v809 = vpop.xlane.xlu0 %808
        %v810 = vadd.f32 %v701, %v703
        %v811 = vadd.f32 %v810, %v705
        %v812 = vadd.f32 %v811, %v707
        %813 = vadd.xlane.f32.xlu0 %v812
        %v814 = vpop.xlane.xlu0 %813
        %v815 = vadd.f32 %v709, %v711
        %v816 = vadd.f32 %v815, %v713
        %v817 = vadd.f32 %v816, %v715
        %818 = vadd.xlane.f32.xlu0 %v817
        %v819 = vpop.xlane.xlu0 %818
        %v820 = vadd.f32 %v717, %v719
        %v821 = vadd.f32 %v820, %v721
        %v822 = vadd.f32 %v821, %v723
        %823 = vadd.xlane.f32.xlu0 %v822
        %v824 = vpop.xlane.xlu0 %823
        %v825 = vadd.f32 %v725, %v727
        %v826 = vadd.f32 %v825, %v729
        %v827 = vadd.f32 %v826, %v731
        %828 = vadd.xlane.f32.xlu0 %v827
        %v829 = vpop.xlane.xlu0 %828
        %v830 = vadd.f32 %v733, %v735
        %v831 = vadd.f32 %v830, %v737
        %v832 = vadd.f32 %v831, %v739
        %833 = vadd.xlane.f32.xlu0 %v832
        %v834 = vpop.xlane.xlu0 %833
        %v835 = vadd.f32 %v741, %v743
        %v836 = vadd.f32 %v835, %v745
        %v837 = vadd.f32 %v836, %v747
        %838 = vadd.xlane.f32.xlu0 %v837
        %v839 = vpop.xlane.xlu0 %838
        %v840 = vadd.f32 %v749, %v751
        %v841 = vadd.f32 %v840, %v753
        %v842 = vadd.f32 %v841, %v755
        %843 = vadd.xlane.f32.xlu0 %v842
        %v844 = vpop.xlane.xlu0 %843
        %v845 = vadd.f32 %v757, %v759
        %v846 = vadd.f32 %v845, %v761
        %v847 = vadd.f32 %v846, %v763
        %848 = vadd.xlane.f32.xlu0 %v847
        %v849 = vpop.xlane.xlu0 %848
        %v850 = vadd.f32 %v765, %v767
        %v851 = vadd.f32 %v850, %v769
        %v852 = vadd.f32 %v851, %v771
        %853 = vadd.xlane.f32.xlu0 %v852
        %v854 = vpop.xlane.xlu0 %853
        %v855 = vadd.f32 %v773, %v775
        %v856 = vadd.f32 %v855, %v777
        %v857 = vadd.f32 %v856, %v779
        %858 = vadd.xlane.f32.xlu0 %v857
        %v859 = vpop.xlane.xlu0 %858
        %v860 = vadd.f32 %v380, %v381
        %v861 = vadd.f32 %v860, %v382
        %v862 = vadd.f32 %v861, %v383
        %863 = vadd.xlane.f32.xlu0 %v862
        %v864 = vpop.xlane.xlu0 %863
        %v865 = vadd.f32 %v384, %v385
        %v866 = vadd.f32 %v865, %v386
        %v867 = vadd.f32 %v866, %v387
        %868 = vadd.xlane.f32.xlu0 %v867
        %v869 = vpop.xlane.xlu0 %868
        %v870 = vadd.f32 %v388, %v389
        %v871 = vadd.f32 %v870, %v390
        %v872 = vadd.f32 %v871, %v391
        %873 = vadd.xlane.f32.xlu0 %v872
        %v874 = vpop.xlane.xlu0 %873
        %v875 = vadd.f32 %v392, %v393
        %v876 = vadd.f32 %v875, %v394
        %v877 = vadd.f32 %v876, %v395
        %878 = vadd.xlane.f32.xlu0 %v877
        %v879 = vpop.xlane.xlu0 %878
        %v880 = vadd.f32 %v396, %v397
        %v881 = vadd.f32 %v880, %v398
        %v882 = vadd.f32 %v881, %v399
        %883 = vadd.xlane.f32.xlu0 %v882
        %v884 = vpop.xlane.xlu0 %883
        %v885 = vadd.f32 %v400, %v401
        %v886 = vadd.f32 %v885, %v402
        %v887 = vadd.f32 %v886, %v403
        %888 = vadd.xlane.f32.xlu0 %v887
        %v889 = vpop.xlane.xlu0 %888
        %v890 = vadd.f32 %v404, %v405
        %v891 = vadd.f32 %v890, %v406
        %v892 = vadd.f32 %v891, %v407
        %893 = vadd.xlane.f32.xlu0 %v892
        %v894 = vpop.xlane.xlu0 %893
        %v895 = vadd.f32 %v408, %v409
        %v896 = vadd.f32 %v895, %v410
        %v897 = vadd.f32 %v896, %v411
        %898 = vadd.xlane.f32.xlu0 %v897
        %v899 = vpop.xlane.xlu0 %898
        %v900 = vadd.f32 %v412, %v413
        %v901 = vadd.f32 %v900, %v414
        %v902 = vadd.f32 %v901, %v415
        %903 = vadd.xlane.f32.xlu0 %v902
        %v904 = vpop.xlane.xlu0 %903
        %v905 = vadd.f32 %v416, %v417
        %v906 = vadd.f32 %v905, %v418
        %v907 = vadd.f32 %v906, %v419
        %908 = vadd.xlane.f32.xlu0 %v907
        %v909 = vpop.xlane.xlu0 %908
        %v910 = vadd.f32 %v420, %v421
        %v911 = vadd.f32 %v910, %v422
        %v912 = vadd.f32 %v911, %v423
        %913 = vadd.xlane.f32.xlu0 %v912
        %v914 = vpop.xlane.xlu0 %913
        %v915 = vadd.f32 %v424, %v425
        %v916 = vadd.f32 %v915, %v426
        %v917 = vadd.f32 %v916, %v427
        %918 = vadd.xlane.f32.xlu0 %v917
        %v919 = vpop.xlane.xlu0 %918
        %v920 = vadd.f32 %v428, %v429
        %v921 = vadd.f32 %v920, %v430
        %v922 = vadd.f32 %v921, %v431
        %923 = vadd.xlane.f32.xlu0 %v922
        %v924 = vpop.xlane.xlu0 %923
        %v925 = vadd.f32 %v432, %v433
        %v926 = vadd.f32 %v925, %v434
        %v927 = vadd.f32 %v926, %v435
        %928 = vadd.xlane.f32.xlu0 %v927
        %v929 = vpop.xlane.xlu0 %928
        %v930 = vadd.f32 %v436, %v437
        %v931 = vadd.f32 %v930, %v438
        %v932 = vadd.f32 %v931, %v439
        %933 = vadd.xlane.f32.xlu0 %v932
        %v934 = vpop.xlane.xlu0 %933
        %v935 = vadd.f32 %v440, %v441
        %v936 = vadd.f32 %v935, %v442
        %v937 = vadd.f32 %v936, %v443
        %938 = vadd.xlane.f32.xlu0 %v937
        %v939 = vpop.xlane.xlu0 %938
        %v940 = vmul.f32 %v588, %v380
        %v941 = vmul.f32 %v589, %v381
        %v942 = vmul.f32 %v590, %v382
        %v943 = vmul.f32 %v591, %v383
        %v944 = vmul.f32 %v592, %v384
        %v945 = vmul.f32 %v593, %v385
        %v946 = vmul.f32 %v594, %v386
        %v947 = vmul.f32 %v595, %v387
        %v948 = vmul.f32 %v596, %v388
        %v949 = vmul.f32 %v597, %v389
        %v950 = vmul.f32 %v598, %v390
        %v951 = vmul.f32 %v599, %v391
        %v952 = vmul.f32 %v600, %v392
        %v953 = vmul.f32 %v601, %v393
        %v954 = vmul.f32 %v602, %v394
        %v955 = vmul.f32 %v603, %v395
        %v956 = vmul.f32 %v604, %v396
        %v957 = vmul.f32 %v605, %v397
        %v958 = vmul.f32 %v606, %v398
        %v959 = vmul.f32 %v607, %v399
        %v960 = vmul.f32 %v608, %v400
        %v961 = vmul.f32 %v609, %v401
        %v962 = vmul.f32 %v610, %v402
        %v963 = vmul.f32 %v611, %v403
        %v964 = vmul.f32 %v612, %v404
        %v965 = vmul.f32 %v613, %v405
        %v966 = vmul.f32 %v614, %v406
        %v967 = vmul.f32 %v615, %v407
        %v968 = vmul.f32 %v616, %v408
        %v969 = vmul.f32 %v617, %v409
        %v970 = vmul.f32 %v618, %v410
        %v971 = vmul.f32 %v619, %v411
        %v972 = vmul.f32 %v620, %v412
        %v973 = vmul.f32 %v621, %v413
        %v974 = vmul.f32 %v622, %v414
        %v975 = vmul.f32 %v623, %v415
        %v976 = vmul.f32 %v624, %v416
        %v977 = vmul.f32 %v625, %v417
        %v978 = vmul.f32 %v626, %v418
        %v979 = vmul.f32 %v627, %v419
        %v980 = vmul.f32 %v628, %v420
        %v981 = vmul.f32 %v629, %v421
        %v982 = vmul.f32 %v630, %v422
        %v983 = vmul.f32 %v631, %v423
        %v984 = vmul.f32 %v632, %v424
        %v985 = vmul.f32 %v633, %v425
        %v986 = vmul.f32 %v634, %v426
        %v987 = vmul.f32 %v635, %v427
        %v988 = vmul.f32 %v636, %v428
        %v989 = vmul.f32 %v637, %v429
        %v990 = vmul.f32 %v638, %v430
        %v991 = vmul.f32 %v639, %v431
        %v992 = vmul.f32 %v640, %v432
        %v993 = vmul.f32 %v641, %v433
        %v994 = vmul.f32 %v642, %v434
        %v995 = vmul.f32 %v643, %v435
        %v996 = vmul.f32 %v644, %v436
        %v997 = vmul.f32 %v645, %v437
        %v998 = vmul.f32 %v646, %v438
        %v999 = vmul.f32 %v647, %v439
        %v1000 = vmul.f32 %v648, %v440
        %v1001 = vmul.f32 %v649, %v441
        %v1002 = vmul.f32 %v650, %v442
        %v1003 = vmul.f32 %v651, %v443
        %v1004 = vadd.f32 %v940, %v941
        %v1005 = vadd.f32 %v1004, %v942
        %v1006 = vadd.f32 %v1005, %v943
        %1007 = vadd.xlane.f32.xlu0 %v1006
        %v1008 = vpop.xlane.xlu0 %1007
        %v1009 = vadd.f32 %v944, %v945
        %v1010 = vadd.f32 %v1009, %v946
        %v1011 = vadd.f32 %v1010, %v947
        %1012 = vadd.xlane.f32.xlu0 %v1011
        %v1013 = vpop.xlane.xlu0 %1012
        %v1014 = vadd.f32 %v948, %v949
        %v1015 = vadd.f32 %v1014, %v950
        %v1016 = vadd.f32 %v1015, %v951
        %1017 = vadd.xlane.f32.xlu0 %v1016
        %v1018 = vpop.xlane.xlu0 %1017
        %v1019 = vadd.f32 %v952, %v953
        %v1020 = vadd.f32 %v1019, %v954
        %v1021 = vadd.f32 %v1020, %v955
        %1022 = vadd.xlane.f32.xlu0 %v1021
        %v1023 = vpop.xlane.xlu0 %1022
        %v1024 = vadd.f32 %v956, %v957
        %v1025 = vadd.f32 %v1024, %v958
        %v1026 = vadd.f32 %v1025, %v959
        %1027 = vadd.xlane.f32.xlu0 %v1026
        %v1028 = vpop.xlane.xlu0 %1027
        %v1029 = vadd.f32 %v960, %v961
        %v1030 = vadd.f32 %v1029, %v962
        %v1031 = vadd.f32 %v1030, %v963
        %1032 = vadd.xlane.f32.xlu0 %v1031
        %v1033 = vpop.xlane.xlu0 %1032
        %v1034 = vadd.f32 %v964, %v965
        %v1035 = vadd.f32 %v1034, %v966
        %v1036 = vadd.f32 %v1035, %v967
        %1037 = vadd.xlane.f32.xlu0 %v1036
        %v1038 = vpop.xlane.xlu0 %1037
        %v1039 = vadd.f32 %v968, %v969
        %v1040 = vadd.f32 %v1039, %v970
        %v1041 = vadd.f32 %v1040, %v971
        %1042 = vadd.xlane.f32.xlu0 %v1041
        %v1043 = vpop.xlane.xlu0 %1042
        %v1044 = vadd.f32 %v972, %v973
        %v1045 = vadd.f32 %v1044, %v974
        %v1046 = vadd.f32 %v1045, %v975
        %1047 = vadd.xlane.f32.xlu0 %v1046
        %v1048 = vpop.xlane.xlu0 %1047
        %v1049 = vadd.f32 %v976, %v977
        %v1050 = vadd.f32 %v1049, %v978
        %v1051 = vadd.f32 %v1050, %v979
        %1052 = vadd.xlane.f32.xlu0 %v1051
        %v1053 = vpop.xlane.xlu0 %1052
        %v1054 = vadd.f32 %v980, %v981
        %v1055 = vadd.f32 %v1054, %v982
        %v1056 = vadd.f32 %v1055, %v983
        %1057 = vadd.xlane.f32.xlu0 %v1056
        %v1058 = vpop.xlane.xlu0 %1057
        %v1059 = vadd.f32 %v984, %v985
        %v1060 = vadd.f32 %v1059, %v986
        %v1061 = vadd.f32 %v1060, %v987
        %1062 = vadd.xlane.f32.xlu0 %v1061
        %v1063 = vpop.xlane.xlu0 %1062
        %v1064 = vadd.f32 %v988, %v989
        %v1065 = vadd.f32 %v1064, %v990
        %v1066 = vadd.f32 %v1065, %v991
        %1067 = vadd.xlane.f32.xlu0 %v1066
        %v1068 = vpop.xlane.xlu0 %1067
        %v1069 = vadd.f32 %v992, %v993
        %v1070 = vadd.f32 %v1069, %v994
        %v1071 = vadd.f32 %v1070, %v995
        %1072 = vadd.xlane.f32.xlu0 %v1071
        %v1073 = vpop.xlane.xlu0 %1072
        %v1074 = vadd.f32 %v996, %v997
        %v1075 = vadd.f32 %v1074, %v998
        %v1076 = vadd.f32 %v1075, %v999
        %1077 = vadd.xlane.f32.xlu0 %v1076
        %v1078 = vpop.xlane.xlu0 %1077
        %v1079 = vadd.f32 %v1000, %v1001
        %v1080 = vadd.f32 %v1079, %v1002
        %v1081 = vadd.f32 %v1080, %v1003
        %1082 = vadd.xlane.f32.xlu0 %v1081
        %v1083 = vpop.xlane.xlu0 %1082
        %v1084 = vlog2.pop %v784
        %v1085 = vmul.f32 %v1084, 0.6931472
        %v1086 = vlog2.pop %v789
        %v1087 = vmul.f32 %v1086, 0.6931472
        %v1088 = vlog2.pop %v794
        %v1089 = vmul.f32 %v1088, 0.6931472
        %v1090 = vlog2.pop %v799
        %v1091 = vmul.f32 %v1090, 0.6931472
        %v1092 = vlog2.pop %v804
        %v1093 = vmul.f32 %v1092, 0.6931472
        %v1094 = vlog2.pop %v809
        %v1095 = vmul.f32 %v1094, 0.6931472
        %v1096 = vlog2.pop %v814
        %v1097 = vmul.f32 %v1096, 0.6931472
        %v1098 = vlog2.pop %v819
        %v1099 = vmul.f32 %v1098, 0.6931472
        %v1100 = vlog2.pop %v824
        %v1101 = vmul.f32 %v1100, 0.6931472
        %v1102 = vlog2.pop %v829
        %v1103 = vmul.f32 %v1102, 0.6931472
        %v1104 = vlog2.pop %v834
        %v1105 = vmul.f32 %v1104, 0.6931472
        %v1106 = vlog2.pop %v839
        %v1107 = vmul.f32 %v1106, 0.6931472
        %v1108 = vlog2.pop %v844
        %v1109 = vmul.f32 %v1108, 0.6931472
        %v1110 = vlog2.pop %v849
        %v1111 = vmul.f32 %v1110, 0.6931472
        %v1112 = vlog2.pop %v854
        %v1113 = vmul.f32 %v1112, 0.6931472
        %v1114 = vlog2.pop %v859
        %v1115 = vmul.f32 %v1114, 0.6931472
        %v1116 = vrcp.pop %v864
        %v1117 = vmul.f32 %v864, %v1116
        %v1118 = vsub.f32 1.0, %v1117
        %v1119 = vmul.f32 %v1116, %v1118
        %v1120 = vadd.f32 %v1116, %v1119
        %vm1121 = vweird.f32 %v864
        %vm1122 = vweird.f32 %v1116
        %vm1123 = vmor %vm1121, %vm1122
        %v1124 = vsel %vm1123, %v1116, %v1120
        %v1125 = vand.u32 2147483647, %v864
        %vm1126 = vcmp.eq.f32.partialorder %v1125, 8.507059e+37
        %v1127 = vand.u32 %v864, 2147483648
        %v1128 = vor.u32 1.1754944e-38, %v1127
        %v1129 = vsel %vm1126, %v1128, %v1124
        %v1130 = vmul.f32 %v1008, %v1129
        %v1131 = vrcp.pop %v869
        %v1132 = vmul.f32 %v869, %v1131
        %v1133 = vsub.f32 1.0, %v1132
        %v1134 = vmul.f32 %v1131, %v1133
        %v1135 = vadd.f32 %v1131, %v1134
        %vm1136 = vweird.f32 %v869
        %vm1137 = vweird.f32 %v1131
        %vm1138 = vmor %vm1136, %vm1137
        %v1139 = vsel %vm1138, %v1131, %v1135
        %v1140 = vand.u32 2147483647, %v869
        %vm1141 = vcmp.eq.f32.partialorder %v1140, 8.507059e+37
        %v1142 = vand.u32 %v869, 2147483648
        %v1143 = vor.u32 1.1754944e-38, %v1142
        %v1144 = vsel %vm1141, %v1143, %v1139
        %v1145 = vmul.f32 %v1013, %v1144
        %v1146 = vrcp.pop %v874
        %v1147 = vmul.f32 %v874, %v1146
        %v1148 = vsub.f32 1.0, %v1147
        %v1149 = vmul.f32 %v1146, %v1148
        %v1150 = vadd.f32 %v1146, %v1149
        %vm1151 = vweird.f32 %v874
        %vm1152 = vweird.f32 %v1146
        %vm1153 = vmor %vm1151, %vm1152
        %v1154 = vsel %vm1153, %v1146, %v1150
        %v1155 = vand.u32 2147483647, %v874
        %vm1156 = vcmp.eq.f32.partialorder %v1155, 8.507059e+37
        %v1157 = vand.u32 %v874, 2147483648
        %v1158 = vor.u32 1.1754944e-38, %v1157
        %v1159 = vsel %vm1156, %v1158, %v1154
        %v1160 = vmul.f32 %v1018, %v1159
        %v1161 = vrcp.pop %v879
        %v1162 = vmul.f32 %v879, %v1161
        %v1163 = vsub.f32 1.0, %v1162
        %v1164 = vmul.f32 %v1161, %v1163
        %v1165 = vadd.f32 %v1161, %v1164
        %vm1166 = vweird.f32 %v879
        %vm1167 = vweird.f32 %v1161
        %vm1168 = vmor %vm1166, %vm1167
        %v1169 = vsel %vm1168, %v1161, %v1165
        %v1170 = vand.u32 2147483647, %v879
        %vm1171 = vcmp.eq.f32.partialorder %v1170, 8.507059e+37
        %v1172 = vand.u32 %v879, 2147483648
        %v1173 = vor.u32 1.1754944e-38, %v1172
        %v1174 = vsel %vm1171, %v1173, %v1169
        %v1175 = vmul.f32 %v1023, %v1174
        %v1176 = vrcp.pop %v884
        %v1177 = vmul.f32 %v884, %v1176
        %v1178 = vsub.f32 1.0, %v1177
        %v1179 = vmul.f32 %v1176, %v1178
        %v1180 = vadd.f32 %v1176, %v1179
        %vm1181 = vweird.f32 %v884
        %vm1182 = vweird.f32 %v1176
        %vm1183 = vmor %vm1181, %vm1182
        %v1184 = vsel %vm1183, %v1176, %v1180
        %v1185 = vand.u32 2147483647, %v884
        %vm1186 = vcmp.eq.f32.partialorder %v1185, 8.507059e+37
        %v1187 = vand.u32 %v884, 2147483648
        %v1188 = vor.u32 1.1754944e-38, %v1187
        %v1189 = vsel %vm1186, %v1188, %v1184
        %v1190 = vmul.f32 %v1028, %v1189
        %v1191 = vrcp.pop %v889
        %v1192 = vmul.f32 %v889, %v1191
        %v1193 = vsub.f32 1.0, %v1192
        %v1194 = vmul.f32 %v1191, %v1193
        %v1195 = vadd.f32 %v1191, %v1194
        %vm1196 = vweird.f32 %v889
        %vm1197 = vweird.f32 %v1191
        %vm1198 = vmor %vm1196, %vm1197
        %v1199 = vsel %vm1198, %v1191, %v1195
        %v1200 = vand.u32 2147483647, %v889
        %vm1201 = vcmp.eq.f32.partialorder %v1200, 8.507059e+37
        %v1202 = vand.u32 %v889, 2147483648
        %v1203 = vor.u32 1.1754944e-38, %v1202
        %v1204 = vsel %vm1201, %v1203, %v1199
        %v1205 = vmul.f32 %v1033, %v1204
        %v1206 = vrcp.pop %v894
        %v1207 = vmul.f32 %v894, %v1206
        %v1208 = vsub.f32 1.0, %v1207
        %v1209 = vmul.f32 %v1206, %v1208
        %v1210 = vadd.f32 %v1206, %v1209
        %vm1211 = vweird.f32 %v894
        %vm1212 = vweird.f32 %v1206
        %vm1213 = vmor %vm1211, %vm1212
        %v1214 = vsel %vm1213, %v1206, %v1210
        %v1215 = vand.u32 2147483647, %v894
        %vm1216 = vcmp.eq.f32.partialorder %v1215, 8.507059e+37
        %v1217 = vand.u32 %v894, 2147483648
        %v1218 = vor.u32 1.1754944e-38, %v1217
        %v1219 = vsel %vm1216, %v1218, %v1214
        %v1220 = vmul.f32 %v1038, %v1219
        %v1221 = vrcp.pop %v899
        %v1222 = vmul.f32 %v899, %v1221
        %v1223 = vsub.f32 1.0, %v1222
        %v1224 = vmul.f32 %v1221, %v1223
        %v1225 = vadd.f32 %v1221, %v1224
        %vm1226 = vweird.f32 %v899
        %vm1227 = vweird.f32 %v1221
        %vm1228 = vmor %vm1226, %vm1227
        %v1229 = vsel %vm1228, %v1221, %v1225
        %v1230 = vand.u32 2147483647, %v899
        %vm1231 = vcmp.eq.f32.partialorder %v1230, 8.507059e+37
        %v1232 = vand.u32 %v899, 2147483648
        %v1233 = vor.u32 1.1754944e-38, %v1232
        %v1234 = vsel %vm1231, %v1233, %v1229
        %v1235 = vmul.f32 %v1043, %v1234
        %v1236 = vrcp.pop %v904
        %v1237 = vmul.f32 %v904, %v1236
        %v1238 = vsub.f32 1.0, %v1237
        %v1239 = vmul.f32 %v1236, %v1238
        %v1240 = vadd.f32 %v1236, %v1239
        %vm1241 = vweird.f32 %v904
        %vm1242 = vweird.f32 %v1236
        %vm1243 = vmor %vm1241, %vm1242
        %v1244 = vsel %vm1243, %v1236, %v1240
        %v1245 = vand.u32 2147483647, %v904
        %vm1246 = vcmp.eq.f32.partialorder %v1245, 8.507059e+37
        %v1247 = vand.u32 %v904, 2147483648
        %v1248 = vor.u32 1.1754944e-38, %v1247
        %v1249 = vsel %vm1246, %v1248, %v1244
        %v1250 = vmul.f32 %v1048, %v1249
        %v1251 = vrcp.pop %v909
        %v1252 = vmul.f32 %v909, %v1251
        %v1253 = vsub.f32 1.0, %v1252
        %v1254 = vmul.f32 %v1251, %v1253
        %v1255 = vadd.f32 %v1251, %v1254
        %vm1256 = vweird.f32 %v909
        %vm1257 = vweird.f32 %v1251
        %vm1258 = vmor %vm1256, %vm1257
        %v1259 = vsel %vm1258, %v1251, %v1255
        %v1260 = vand.u32 2147483647, %v909
        %vm1261 = vcmp.eq.f32.partialorder %v1260, 8.507059e+37
        %v1262 = vand.u32 %v909, 2147483648
        %v1263 = vor.u32 1.1754944e-38, %v1262
        %v1264 = vsel %vm1261, %v1263, %v1259
        %v1265 = vmul.f32 %v1053, %v1264
        %v1266 = vrcp.pop %v914
        %v1267 = vmul.f32 %v914, %v1266
        %v1268 = vsub.f32 1.0, %v1267
        %v1269 = vmul.f32 %v1266, %v1268
        %v1270 = vadd.f32 %v1266, %v1269
        %vm1271 = vweird.f32 %v914
        %vm1272 = vweird.f32 %v1266
        %vm1273 = vmor %vm1271, %vm1272
        %v1274 = vsel %vm1273, %v1266, %v1270
        %v1275 = vand.u32 2147483647, %v914
        %vm1276 = vcmp.eq.f32.partialorder %v1275, 8.507059e+37
        %v1277 = vand.u32 %v914, 2147483648
        %v1278 = vor.u32 1.1754944e-38, %v1277
        %v1279 = vsel %vm1276, %v1278, %v1274
        %v1280 = vmul.f32 %v1058, %v1279
        %v1281 = vrcp.pop %v919
        %v1282 = vmul.f32 %v919, %v1281
        %v1283 = vsub.f32 1.0, %v1282
        %v1284 = vmul.f32 %v1281, %v1283
        %v1285 = vadd.f32 %v1281, %v1284
        %vm1286 = vweird.f32 %v919
        %vm1287 = vweird.f32 %v1281
        %vm1288 = vmor %vm1286, %vm1287
        %v1289 = vsel %vm1288, %v1281, %v1285
        %v1290 = vand.u32 2147483647, %v919
        %vm1291 = vcmp.eq.f32.partialorder %v1290, 8.507059e+37
        %v1292 = vand.u32 %v919, 2147483648
        %v1293 = vor.u32 1.1754944e-38, %v1292
        %v1294 = vsel %vm1291, %v1293, %v1289
        %v1295 = vmul.f32 %v1063, %v1294
        %v1296 = vrcp.pop %v924
        %v1297 = vmul.f32 %v924, %v1296
        %v1298 = vsub.f32 1.0, %v1297
        %v1299 = vmul.f32 %v1296, %v1298
        %v1300 = vadd.f32 %v1296, %v1299
        %vm1301 = vweird.f32 %v924
        %vm1302 = vweird.f32 %v1296
        %vm1303 = vmor %vm1301, %vm1302
        %v1304 = vsel %vm1303, %v1296, %v1300
        %v1305 = vand.u32 2147483647, %v924
        %vm1306 = vcmp.eq.f32.partialorder %v1305, 8.507059e+37
        %v1307 = vand.u32 %v924, 2147483648
        %v1308 = vor.u32 1.1754944e-38, %v1307
        %v1309 = vsel %vm1306, %v1308, %v1304
        %v1310 = vmul.f32 %v1068, %v1309
        %v1311 = vrcp.pop %v929
        %v1312 = vmul.f32 %v929, %v1311
        %v1313 = vsub.f32 1.0, %v1312
        %v1314 = vmul.f32 %v1311, %v1313
        %v1315 = vadd.f32 %v1311, %v1314
        %vm1316 = vweird.f32 %v929
        %vm1317 = vweird.f32 %v1311
        %vm1318 = vmor %vm1316, %vm1317
        %v1319 = vsel %vm1318, %v1311, %v1315
        %v1320 = vand.u32 2147483647, %v929
        %vm1321 = vcmp.eq.f32.partialorder %v1320, 8.507059e+37
        %v1322 = vand.u32 %v929, 2147483648
        %v1323 = vor.u32 1.1754944e-38, %v1322
        %v1324 = vsel %vm1321, %v1323, %v1319
        %v1325 = vmul.f32 %v1073, %v1324
        %v1326 = vrcp.pop %v934
        %v1327 = vmul.f32 %v934, %v1326
        %v1328 = vsub.f32 1.0, %v1327
        %v1329 = vmul.f32 %v1326, %v1328
        %v1330 = vadd.f32 %v1326, %v1329
        %vm1331 = vweird.f32 %v934
        %vm1332 = vweird.f32 %v1326
        %vm1333 = vmor %vm1331, %vm1332
        %v1334 = vsel %vm1333, %v1326, %v1330
        %v1335 = vand.u32 2147483647, %v934
        %vm1336 = vcmp.eq.f32.partialorder %v1335, 8.507059e+37
        %v1337 = vand.u32 %v934, 2147483648
        %v1338 = vor.u32 1.1754944e-38, %v1337
        %v1339 = vsel %vm1336, %v1338, %v1334
        %v1340 = vmul.f32 %v1078, %v1339
        %v1341 = vrcp.pop %v939
        %v1342 = vmul.f32 %v939, %v1341
        %v1343 = vsub.f32 1.0, %v1342
        %v1344 = vmul.f32 %v1341, %v1343
        %v1345 = vadd.f32 %v1341, %v1344
        %vm1346 = vweird.f32 %v939
        %vm1347 = vweird.f32 %v1341
        %vm1348 = vmor %vm1346, %vm1347
        %v1349 = vsel %vm1348, %v1341, %v1345
        %v1350 = vand.u32 2147483647, %v939
        %vm1351 = vcmp.eq.f32.partialorder %v1350, 8.507059e+37
        %v1352 = vand.u32 %v939, 2147483648
        %v1353 = vor.u32 1.1754944e-38, %v1352
        %v1354 = vsel %vm1351, %v1353, %v1349
        %v1355 = vmul.f32 %v1083, %v1354
        %v1356 = vsub.f32 %v1085, %v1130
        %v1357 = vsub.f32 %v1087, %v1145
        %v1358 = vsub.f32 %v1089, %v1160
        %v1359 = vsub.f32 %v1091, %v1175
        %v1360 = vsub.f32 %v1093, %v1190
        %v1361 = vsub.f32 %v1095, %v1205
        %v1362 = vsub.f32 %v1097, %v1220
        %v1363 = vsub.f32 %v1099, %v1235
        %v1364 = vsub.f32 %v1101, %v1250
        %v1365 = vsub.f32 %v1103, %v1265
        %v1366 = vsub.f32 %v1105, %v1280
        %v1367 = vsub.f32 %v1107, %v1295
        %v1368 = vsub.f32 %v1109, %v1310
        %v1369 = vsub.f32 %v1111, %v1325
        %v1370 = vsub.f32 %v1113, %v1340
        %v1371 = vsub.f32 %v1115, %v1355
        %s1372 = smul.u32 %s22, 128
        %v1373 = vlaneseq
        %v1374 = vshrl.u32 %v1373, 7
        %v1375 = vadd.s32 %v1374, 8
        %v1376 = vadd.s32 %v1374, 16
        %v1377 = vadd.s32 %v1374, 24
        %v1378 = vadd.s32 %v1374, 32
        %v1379 = vadd.s32 %v1374, 40
        %v1380 = vadd.s32 %v1374, 48
        %v1381 = vadd.s32 %v1374, 56
        %v1382 = vadd.s32 %v1374, 64
        %v1383 = vadd.s32 %v1374, 72
        %v1384 = vadd.s32 %v1374, 80
        %v1385 = vadd.s32 %v1374, 88
        %v1386 = vadd.s32 %v1374, 96
        %v1387 = vadd.s32 %v1374, 104
        %v1388 = vadd.s32 %v1374, 112
        %v1389 = vadd.s32 %v1374, 120
        %v1390 = vstv %s1372
        %v1391 = vadd.s32 %v1390, %v1374
        %v1392 = vadd.s32 %v1390, %v1375
        %v1393 = vadd.s32 %v1390, %v1376
        %v1394 = vadd.s32 %v1390, %v1377
        %v1395 = vadd.s32 %v1390, %v1378
        %v1396 = vadd.s32 %v1390, %v1379
        %v1397 = vadd.s32 %v1390, %v1380
        %v1398 = vadd.s32 %v1390, %v1381
        %v1399 = vadd.s32 %v1390, %v1382
        %v1400 = vadd.s32 %v1390, %v1383
        %v1401 = vadd.s32 %v1390, %v1384
        %v1402 = vadd.s32 %v1390, %v1385
        %v1403 = vadd.s32 %v1390, %v1386
        %v1404 = vadd.s32 %v1390, %v1387
        %v1405 = vadd.s32 %v1390, %v1388
        %v1406 = vadd.s32 %v1390, %v1389
        %vm1407 = vcmp.lt.s32.totalorder %v1391, 200
        %vm1408 = vcmp.lt.s32.totalorder %v1392, 200
        %vm1409 = vcmp.lt.s32.totalorder %v1393, 200
        %vm1410 = vcmp.lt.s32.totalorder %v1394, 200
        %vm1411 = vcmp.lt.s32.totalorder %v1395, 200
        %vm1412 = vcmp.lt.s32.totalorder %v1396, 200
        %vm1413 = vcmp.lt.s32.totalorder %v1397, 200
        %vm1414 = vcmp.lt.s32.totalorder %v1398, 200
        %vm1415 = vcmp.lt.s32.totalorder %v1399, 200
        %vm1416 = vcmp.lt.s32.totalorder %v1400, 200
        %vm1417 = vcmp.lt.s32.totalorder %v1401, 200
        %vm1418 = vcmp.lt.s32.totalorder %v1402, 200
        %vm1419 = vcmp.lt.s32.totalorder %v1403, 200
        %vm1420 = vcmp.lt.s32.totalorder %v1404, 200
        %vm1421 = vcmp.lt.s32.totalorder %v1405, 200
        %vm1422 = vcmp.lt.s32.totalorder %v1406, 200
        %v1423 = vsel %vm1407, %v1356, 0.0
        %v1424 = vsel %vm1408, %v1357, 0.0
        %v1425 = vsel %vm1409, %v1358, 0.0
        %v1426 = vsel %vm1410, %v1359, 0.0
        %v1427 = vsel %vm1411, %v1360, 0.0
        %v1428 = vsel %vm1412, %v1361, 0.0
        %v1429 = vsel %vm1413, %v1362, 0.0
        %v1430 = vsel %vm1414, %v1363, 0.0
        %v1431 = vsel %vm1415, %v1364, 0.0
        %v1432 = vsel %vm1416, %v1365, 0.0
        %v1433 = vsel %vm1417, %v1366, 0.0
        %v1434 = vsel %vm1418, %v1367, 0.0
        %v1435 = vsel %vm1419, %v1368, 0.0
        %v1436 = vsel %vm1420, %v1369, 0.0
        %v1437 = vsel %vm1421, %v1370, 0.0
        %v1438 = vsel %vm1422, %v1371, 0.0
        %v1439 = vadd.f32 %v1423, %v1424
        %v1440 = vadd.f32 %v1439, %v1425
        %v1441 = vadd.f32 %v1440, %v1426
        %v1442 = vadd.f32 %v1441, %v1427
        %v1443 = vadd.f32 %v1442, %v1428
        %v1444 = vadd.f32 %v1443, %v1429
        %v1445 = vadd.f32 %v1444, %v1430
        %v1446 = vadd.f32 %v1445, %v1431
        %v1447 = vadd.f32 %v1446, %v1432
        %v1448 = vadd.f32 %v1447, %v1433
        %v1449 = vadd.f32 %v1448, %v1434
        %v1450 = vadd.f32 %v1449, %v1435
        %v1451 = vadd.f32 %v1450, %v1436
        %v1452 = vadd.f32 %v1451, %v1437
        %v1453 = vadd.f32 %v1452, %v1438
        %v1454 = vrot.slane %v1453, 4
        %v1455 = vadd.f32 %v1453, %v1454
        %v1456 = vrot.slane %v1455, 2
        %v1457 = vadd.f32 %v1455, %v1456
        %v1458 = vrot.slane %v1457, 1
        %v1459 = vadd.f32 %v1457, %v1458
        %1460 = vst [vmem:[%s223] sm:$0xff] %v1459
        %s1461 = sand.u32 %s82, 1
        %s1462 = scalar_lea.sflag [#allocation4], %s1461
        %s1463 = sand.u32 %s82, 1
        %s1464 = smul.addr %s1463, 8
        %s1465 = scalar_lea.vmem [#allocation7], %s1464
        // Predicated region
        $region37: #{tpu_custom_call.1} parent=27 // pred_check
          %p1466 = pneg %p92
        $region38: #{tpu_custom_call.1} parent=27 // pred_check_branch
          %1468 = sbr.rel (%p1466) target = $region40
        $region39: #{tpu_custom_call.1} parent=27 // pred_region
          %1470 = vsyncadd %s1462, 0
          %s1471 = smul.addr %s22, 8
          %s1472 = scalar_lea.hbm %s2, %s1471
          %s1474 = sshll.u32 %s1465, 4
          %s1475 = int_to_ptr.vmem [resolvable:$true] %s1474
          %s1476 = sshll.u32 %s1472, 4
          %s1477 = int_to_ptr.hbm [resolvable:$true] %s1476
          %1479 = dma.vmem_to_hbm [thread:$0]  %s1475, 128, %s1477, %s1462
        $region40: #{tpu_custom_call.1} parent=27 // pred_fallthru
          _
      $region28: #{tpu_custom_call.1} parent=5 // pred_fallthru
        _
      %p1480 = scmp.le.s32.totalorder 2, %s17
      // Predicated region
      $region41: #{tpu_custom_call.1} parent=5 // pred_check
        %p1481 = pneg %p1480
      $region42: #{tpu_custom_call.1} parent=5 // pred_check_branch
        %1483 = sbr.rel (%p1481) target = $region44
      $region43: #{tpu_custom_call.1} parent=5 // pred_region
        %s1484 = ssub.s32 %s17, 2
        // Predicated region
        $region45: #{tpu_custom_call.1} parent=43 // pred_check
          %p1485 = pneg %p98
        $region46: #{tpu_custom_call.1} parent=43 // pred_check_branch
          %1487 = sbr.rel (%p1485) target = $region48
        $region47: #{tpu_custom_call.1} parent=43 // pred_region
          %s1488 = sand.u32 %s83, 1
          %s1489 = scalar_lea.sflag [#allocation4], %s1488
          %s1490 = sand.u32 %s83, 1
          %s1491 = smul.addr %s1490, 8
          %s1492 = scalar_lea.vmem [#allocation7], %s1491
          %1494 = dma.done %s1489, 128
        $region48: #{tpu_custom_call.1} parent=43 // pred_fallthru
          _
      $region44: #{tpu_custom_call.1} parent=5 // pred_fallthru
        _
    $region6: #{tpu_custom_call.1} parent=1 // loop_footer
      %s21 = sadd.s32 1, %s17
    $region7: #{tpu_custom_call.1} parent=1 // loop_footer_branch
      %16 = sbr.rel target = $region3
    $region8: #{tpu_custom_call.1} parent=1 // loop_exit
      _
    %1495 = vsyncpa [#allocation3], 1
    %s1496 = scalar_lea.sflag [#allocation3], 1
    %1497 = vsyncpa %s1496, 1
    %1498 = vsyncpa [#allocation6], 1
    %s1499 = scalar_lea.sflag [#allocation6], 1
    %1500 = vsyncpa %s1499, 1
    %1501 = vsyncpa [#allocation4], 1
    %s1502 = scalar_lea.sflag [#allocation4], 1
    %1503 = vsyncpa %s1502, 1

</llo_original>
